<compile_context>
chip_gen: v5e
topology: v5e:2x2
jax: 0.10.0
libtpu: 0.0.40
codegen_flags: <defaults>
</compile_context>

<pallas_src>
import functools

import jax
import jax.numpy as jnp
from jax import lax
from jax.experimental import pallas as pl
from jax.experimental.pallas import tpu as pltpu


def _vmem_limit_bytes():
    cap = 128 * 1024 * 1024
    try:
        info = pltpu.get_tpu_info()
        cap = int(getattr(info, "vmem_capacity_bytes", cap) or cap)
    except Exception:
        pass
    # leave headroom: ~96 MiB on v5e/v6e (128 MiB VMEM), ~48 MiB on v7x (64 MiB)
    return int(min(96 * 1024 * 1024, cap * 3 // 4))


VMEM_LIMIT = _vmem_limit_bytes()


# ----------------------------- config -------------------------------------
class Cfg:
    hidden_size = 128
    num_hidden_layers = 2
    rms_norm_eps = 1e-6
    num_attention_heads = 4
    hidden_size_per_head = 32
    num_key_value_heads = 2
    mamba_d_state = 64
    mamba_d_conv = 4
    mamba_num_heads = 4
    mamba_step = 2
    intermediate_size = 256
    vocab_size = 1000
    rope_theta = 10000.0
    max_position_embeddings = 2048


def is_mamba(config, i: int) -> bool:
    assert config.mamba_step > 1
    if config.num_hidden_layers <= config.mamba_step // 2:
        return i != config.num_hidden_layers - 1
    return i % config.mamba_step != config.mamba_step // 2


def _pick_weight_tile(n, preferred=(512, 256, 128)):
    for t in preferred:
        if n % t == 0:
            return t
    return n


def _pick_token_tile(T, candidates):
    # prefer the largest tile that still gives >= 2 parallel tiles (v7x: 2 TCs)
    best = None
    for t in candidates:
        if t <= T and T % t == 0:
            if T // t >= 2:
                return t
            if best is None:
                best = t
    return best if best is not None else T


def _maybe_buffered_spec(block_shape, index_map, steps):
    # deeper weight double-buffering only when the reduction stream is long
    # (hides longer weight DMAs on v5e's low HBM BW); plain spec otherwise.
    if steps >= 3:
        return pl.BlockSpec(block_shape, index_map, pipeline_mode=pl.Buffered(3))
    return pl.BlockSpec(block_shape, index_map)


# --------------------- kernel 1: fused norm + QKV + RoPE --------------------
def _qkv_fused_kernel(*refs, has_residual, eps, scale, wq, tk, num_k):
    if has_residual:
        (x_ref, res_ref, prew_ref, wqk_ref, wv_ref, qknw_ref, cos_ref, sin_ref,
         mmat_ref, rmat_ref, q_out, k_out, v_out, res_out,
         xn_scr, accqk_scr, accv_scr) = refs
    else:
        (x_ref, prew_ref, wqk_ref, wv_ref, qknw_ref, cos_ref, sin_ref,
         mmat_ref, rmat_ref, q_out, k_out, v_out,
         xn_scr, accqk_scr, accv_scr) = refs
        res_ref = res_out = None

    kidx = pl.program_id(1)

    @pl.when(kidx == 0)
    def _():
        x = x_ref[...].astype(jnp.float32)
        if has_residual:
            x = x + res_ref[...].astype(jnp.float32)   # fused residual add
            res_out[...] = x.astype(res_out.dtype)     # new residual (f32)
        var = jnp.mean(x * x, axis=-1, keepdims=True)
        xn = x * lax.rsqrt(var + eps) * prew_ref[...]  # pre_mixer_norm
        xn_scr[...] = xn.astype(xn_scr.dtype)          # bf16 for MXU
        accqk_scr[...] = jnp.zeros_like(accqk_scr)
        accv_scr[...] = jnp.zeros_like(accv_scr)

    # streamed K-axis matmuls (bf16 operands, f32 accumulate)
    if num_k == 1:
        xk = xn_scr[...]
    else:
        off = pl.multiple_of(kidx * tk, tk)
        xk = xn_scr[:, pl.ds(off, tk)]
    accqk_scr[...] += jnp.dot(xk, wqk_ref[...], preferred_element_type=jnp.float32)
    accv_scr[...] += jnp.dot(xk, wv_ref[...], preferred_element_type=jnp.float32)

    @pl.when(kidx == num_k - 1)
    def _():
        qk = accqk_scr[...]                            # (tm, (nh+nkv)*d) f32
        # per-head RMSNorm, vectorized: block-diag mean matmul broadcasts the
        # per-head mean(x^2) to every lane of that head in one MXU op.
        mean_b = jnp.dot(qk * qk, mmat_ref[...], preferred_element_type=jnp.float32)
        qkn = qk * lax.rsqrt(mean_b + eps) * qknw_ref[...]
        # neox RoPE, vectorized: signed rotate-half as a block-diag permutation
        # matmul, then full-width cos/sin elementwise (no per-head concat).
        rot = jnp.dot(qkn, rmat_ref[...], preferred_element_type=jnp.float32)
        qkr = qkn * cos_ref[...] + rot * sin_ref[...]
        q_out[...] = (qkr[:, :wq] * scale).astype(q_out.dtype)   # scale folded
        k_out[...] = qkr[:, wq:].astype(k_out.dtype)
        v_out[...] = accv_scr[...].astype(v_out.dtype)


def qkv_fused(x, residual, pre_w, w_qkv, q_norm_w, k_norm_w, cos_tab, sin_tab,
              mean_mat, rot_mat, *, nh, nkv, d, eps, scale, tm, tk):
    T, H = x.shape
    wq, wk = nh * d, nkv * d
    wqk = wq + wk
    assert T % tm == 0 and H % tk == 0
    num_k = H // tk
    has_residual = residual is not None

    # split fused qkv weight into the q|k slab (norm+rope) and the v slab
    w_qk = w_qkv[:, :wqk]
    w_v = w_qkv[:, wqk:]
    qk_norm_w = jnp.concatenate(
        [q_norm_w.reshape(-1), k_norm_w.reshape(-1)]).reshape(1, wqk)

    in_specs = [pl.BlockSpec((tm, H), lambda i, k: (i, 0))]
    args = [x]
    if has_residual:
        in_specs.append(pl.BlockSpec((tm, H), lambda i, k: (i, 0)))
        args.append(residual)
    in_specs += [
        pl.BlockSpec((1, H), lambda i, k: (0, 0)),               # pre_mixer_norm w
        _maybe_buffered_spec((tk, wqk), lambda i, k: (k, 0), num_k),  # qk weight
        _maybe_buffered_spec((tk, wk), lambda i, k: (k, 0), num_k),   # v weight
        pl.BlockSpec((1, wqk), lambda i, k: (0, 0)),             # q|k norm w
        pl.BlockSpec((tm, wqk), lambda i, k: (i, 0)),            # cos table
        pl.BlockSpec((tm, wqk), lambda i, k: (i, 0)),            # sin table
        pl.BlockSpec((wqk, wqk), lambda i, k: (0, 0)),           # per-head mean mat
        pl.BlockSpec((wqk, wqk), lambda i, k: (0, 0)),           # rotate-half mat
    ]
    args += [pre_w.reshape(1, H), w_qk, w_v, qk_norm_w, cos_tab, sin_tab,
             mean_mat, rot_mat]

    out_shape = [jax.ShapeDtypeStruct((T, wq), jnp.bfloat16),
                 jax.ShapeDtypeStruct((T, wk), jnp.bfloat16),
                 jax.ShapeDtypeStruct((T, wk), jnp.bfloat16)]
    out_specs = [pl.BlockSpec((tm, wq), lambda i, k: (i, 0)),
                 pl.BlockSpec((tm, wk), lambda i, k: (i, 0)),
                 pl.BlockSpec((tm, wk), lambda i, k: (i, 0))]
    if has_residual:
        out_shape.append(jax.ShapeDtypeStruct((T, H), jnp.float32))
        out_specs.append(pl.BlockSpec((tm, H), lambda i, k: (i, 0)))

    kernel = functools.partial(_qkv_fused_kernel, has_residual=has_residual,
                               eps=eps, scale=scale, wq=wq, tk=tk, num_k=num_k)
    return pl.pallas_call(
        kernel,
        out_shape=tuple(out_shape),
        grid_spec=pltpu.PrefetchScalarGridSpec(
            num_scalar_prefetch=0,
            grid=(T // tm, num_k),
            in_specs=in_specs,
            out_specs=tuple(out_specs),
            scratch_shapes=[pltpu.VMEM((tm, H), jnp.bfloat16),
                            pltpu.VMEM((tm, wqk), jnp.float32),
                            pltpu.VMEM((tm, wk), jnp.float32)]),
        compiler_params=pltpu.CompilerParams(
            dimension_semantics=("parallel", "arbitrary"),
            vmem_limit_bytes=VMEM_LIMIT),
    )(*args)


# ------------------ kernel 2: causal flash attention (GQA) ------------------
def _flash_attn_kernel(q_ref, k_ref, v_ref, o_ref, m_scr, l_scr, acc_scr, *,
                       nh, group, d, blk):
    qi = pl.program_id(0)
    ki = pl.program_id(1)

    @pl.when(ki == 0)
    def _():
        m_scr[...] = jnp.full(m_scr.shape, -jnp.inf, dtype=m_scr.dtype)
        l_scr[...] = jnp.zeros_like(l_scr)
        acc_scr[...] = jnp.zeros_like(acc_scr)

    def _block(masked):
        q = q_ref[...]                       # (blk, nh*d) bf16, scale pre-folded
        k = k_ref[...]                       # (blk, nkv*d) bf16
        v = v_ref[...]
        if masked:
            row = lax.broadcasted_iota(jnp.int32, (blk, blk), 0)
            col = lax.broadcasted_iota(jnp.int32, (blk, blk), 1)
            tri = col <= row
        for h in range(nh):                  # static unroll over query heads
            g = h // group                   # GQA: shared K/V head
            qh = q[:, h * d:(h + 1) * d]
            kh = k[:, g * d:(g + 1) * d]
            vh = v[:, g * d:(g + 1) * d]
            s = lax.dot_general(qh, kh, (((1,), (1,)), ((), ())),
                                preferred_element_type=jnp.float32)
            if masked:
                s = jnp.where(tri, s, -jnp.inf)
            m_prev = m_scr[:, h:h + 1]
            m_new = jnp.maximum(m_prev, jnp.max(s, axis=-1, keepdims=True))
            alpha = jnp.exp(m_prev - m_new)
            p = jnp.exp(s - m_new)
            l_scr[:, h:h + 1] = (alpha * l_scr[:, h:h + 1]
                                 + jnp.sum(p, axis=-1, keepdims=True))
            acc_scr[:, h * d:(h + 1) * d] = (
                alpha * acc_scr[:, h * d:(h + 1) * d]
                + jnp.dot(p.astype(vh.dtype), vh,
                          preferred_element_type=jnp.float32))
            m_scr[:, h:h + 1] = m_new

    @pl.when(ki < qi)                        # unmasked blocks: no iota/select
    def _():
        _block(masked=False)

    @pl.when(ki == qi)                       # diagonal block: mask + finalize
    def _():
        _block(masked=True)
        for h in range(nh):
            inv = pl.reciprocal(l_scr[:, h:h + 1], approx=True)
            o_ref[:, h * d:(h + 1) * d] = (
                acc_scr[:, h * d:(h + 1) * d] * inv).astype(o_ref.dtype)


def flash_attention(q, k, v, *, nh, nkv, d, blk):
    T = q.shape[0]
    assert nh % nkv == 0 and T % blk == 0
    group = nh // nkv
    num_b = T // blk
    kernel = functools.partial(_flash_attn_kernel, nh=nh, group=group, d=d,
                               blk=blk)
    return pl.pallas_call(
        kernel,
        out_shape=jax.ShapeDtypeStruct((T, nh * d), q.dtype),
        grid_spec=pltpu.PrefetchScalarGridSpec(
            num_scalar_prefetch=0,
            grid=(num_b, num_b),
            in_specs=[
                pl.BlockSpec((blk, nh * d), lambda qi, ki: (qi, 0)),
                # clamp the K/V block index so causally-skipped blocks are
                # never DMA'd (index unchanged -> no new copy issued)
                pl.BlockSpec((blk, nkv * d),
                             lambda qi, ki: (jnp.minimum(ki, qi), 0)),
                pl.BlockSpec((blk, nkv * d),
                             lambda qi, ki: (jnp.minimum(ki, qi), 0)),
            ],
            out_specs=pl.BlockSpec((blk, nh * d), lambda qi, ki: (qi, 0)),
            scratch_shapes=[pltpu.VMEM((blk, nh), jnp.float32),
                            pltpu.VMEM((blk, nh), jnp.float32),
                            pltpu.VMEM((blk, nh * d), jnp.float32)]),
        compiler_params=pltpu.CompilerParams(
            dimension_semantics=("parallel", "arbitrary"),
            vmem_limit_bytes=VMEM_LIMIT),
    )(q, k, v)


# ------- kernel 3: o_proj + post_mixer_norm + residual add + pre_mlp_norm ----
def _oproj_fused_kernel(attn_ref, wo_ref, res_ref, postw_ref, premlpw_ref,
                        mlp_in_ref, res_out_ref, *, eps):
    # single K = nh*D matmul (head reduction collapsed into the contraction)
    y = jnp.dot(attn_ref[...], wo_ref[...], preferred_element_type=jnp.float32)
    var = jnp.mean(y * y, axis=-1, keepdims=True)
    y = y * lax.rsqrt(var + eps) * postw_ref[...]          # post_mixer_norm
    z = y + res_ref[...].astype(jnp.float32)               # residual add
    res_out_ref[...] = z.astype(res_out_ref.dtype)
    var2 = jnp.mean(z * z, axis=-1, keepdims=True)
    mlp_in_ref[...] = (z * lax.rsqrt(var2 + eps)
                       * premlpw_ref[...]).astype(mlp_in_ref.dtype)


def oproj_fused(attn, w_o, residual, post_w, pre_mlp_w, *, eps, tm):
    T, Wq = attn.shape
    H = w_o.shape[-1]
    assert T % tm == 0
    kernel = functools.partial(_oproj_fused_kernel, eps=eps)
    return pl.pallas_call(
        kernel,
        out_shape=(jax.ShapeDtypeStruct((T, H), jnp.bfloat16),   # mlp input
                   jax.ShapeDtypeStruct((T, H), jnp.float32)),   # new residual
        grid_spec=pltpu.PrefetchScalarGridSpec(
            num_scalar_prefetch=0,
            grid=(T // tm,),
            in_specs=[pl.BlockSpec((tm, Wq), lambda i: (i, 0)),
                      pl.BlockSpec((Wq, H), lambda i: (0, 0)),
                      pl.BlockSpec((tm, H), lambda i: (i, 0)),
                      pl.BlockSpec((1, H), lambda i: (0, 0)),
                      pl.BlockSpec((1, H), lambda i: (0, 0))],
            out_specs=(pl.BlockSpec((tm, H), lambda i: (i, 0)),
                       pl.BlockSpec((tm, H), lambda i: (i, 0)))),
        compiler_params=pltpu.CompilerParams(
            dimension_semantics=("parallel",),
            vmem_limit_bytes=VMEM_LIMIT),
    )(attn, w_o, residual, post_w.reshape(1, H), pre_mlp_w.reshape(1, H))


# ----------- kernel 4: merged gate/up + SiLU-mul + down + post_mlp_norm ------
def _mlp_fused_kernel(x_ref, wgu_ref, wd_ref, postw_ref, o_ref, acc_scr, *,
                      eps, ti, num_j):
    j = pl.program_id(1)

    @pl.when(j == 0)
    def _():
        acc_scr[...] = jnp.zeros_like(acc_scr)

    x = x_ref[...]                                              # bf16
    gu = jnp.dot(x, wgu_ref[...], preferred_element_type=jnp.float32)
    g = gu[:, :ti]                                              # 128-aligned split
    u = gu[:, ti:]
    a = g * jax.nn.sigmoid(g) * u                               # SiluAndMul (f32)
    acc_scr[...] += jnp.dot(a.astype(wd_ref.dtype), wd_ref[...],
                            preferred_element_type=jnp.float32)

    @pl.when(j == num_j - 1)
    def _():
        y = acc_scr[...]
        var = jnp.mean(y * y, axis=-1, keepdims=True)
        o_ref[...] = (y * lax.rsqrt(var + eps) * postw_ref[...]).astype(o_ref.dtype)


def mlp_fused(x, w_gate, w_up, w_down, post_w, *, eps, tm, ti):
    T, H = x.shape
    inter = w_gate.shape[1]
    assert T % tm == 0 and inter % ti == 0
    num_j = inter // ti
    # merged [gate_j | up_j] streaming layout: one matmul per reduction step
    # (one-time layout glue done in XLA outside the kernel)
    if num_j == 1:
        w_gu = jnp.concatenate([w_gate, w_up], axis=1)
    else:
        w_gu = jnp.concatenate(
            [w_gate.reshape(H, num_j, ti), w_up.reshape(H, num_j, ti)],
            axis=2).reshape(H, num_j * 2 * ti)
    kernel = functools.partial(_mlp_fused_kernel, eps=eps, ti=ti, num_j=num_j)
    return pl.pallas_call(
        kernel,
        out_shape=jax.ShapeDtypeStruct((T, H), jnp.float32),
        grid_spec=pltpu.PrefetchScalarGridSpec(
            num_scalar_prefetch=0,
            grid=(T // tm, num_j),
            in_specs=[pl.BlockSpec((tm, H), lambda i, j: (i, 0)),
                      _maybe_buffered_spec((H, 2 * ti), lambda i, j: (0, j), num_j),
                      _maybe_buffered_spec((ti, H), lambda i, j: (j, 0), num_j),
                      pl.BlockSpec((1, H), lambda i, j: (0, 0))],
            out_specs=pl.BlockSpec((tm, H), lambda i, j: (i, 0)),
            scratch_shapes=[pltpu.VMEM((tm, H), jnp.float32)]),
        compiler_params=pltpu.CompilerParams(
            dimension_semantics=("parallel", "arbitrary"),
            vmem_limit_bytes=VMEM_LIMIT),
    )(x, w_gu, w_down, post_w.reshape(1, H))


# ------------------------- decoder layer (wrapper) -------------------------
def plamo2_decoder_layer(params, positions, hidden_states, residual, cfg):
    eps = cfg.rms_norm_eps
    T, H = hidden_states.shape
    NH = cfg.num_attention_heads
    NKV = cfg.num_key_value_heads
    D = cfg.hidden_size_per_head
    inter = cfg.intermediate_size
    assert T % 8 == 0, "token count must be a multiple of 8 (pad upstream)"

    tm = _pick_token_tile(T, (256, 128, 64, 32, 16, 8))
    blk_attn = _pick_token_tile(T, (512, 256, 128, 64, 32, 16, 8))
    tk_qkv = _pick_weight_tile(H)
    ti_mlp = _pick_weight_tile(inter)

    # --- rotary / per-head-norm constant tables (setup glue, f32) -----------
    d2 = D // 2
    nqk = NH + NKV
    inv_freq = 1.0 / (cfg.rope_theta **
                      (jnp.arange(0, D, 2, dtype=jnp.float32) / D))
    freqs = positions.astype(jnp.float32)[:, None] * inv_freq[None, :]
    cos_h, sin_h = jnp.cos(freqs), jnp.sin(freqs)                    # (T, d2)
    cos_tab = jnp.tile(jnp.concatenate([cos_h, cos_h], axis=1), (1, nqk))
    sin_tab = jnp.tile(jnp.concatenate([sin_h, sin_h], axis=1), (1, nqk))
    # block-diag signed rotate-half (neox RoPE) and per-head mean (RMSNorm)
    r_head = jnp.zeros((D, D), jnp.float32)
    r_head = r_head.at[d2 + jnp.arange(d2), jnp.arange(d2)].set(-1.0)
    r_head = r_head.at[jnp.arange(d2), d2 + jnp.arange(d2)].set(1.0)
    eye = jnp.eye(nqk, dtype=jnp.float32)
    rot_mat = jnp.kron(eye, r_head)
    mean_mat = jnp.kron(eye, jnp.full((D, D), 1.0 / D, jnp.float32))

    # 1) fused (residual add +) pre_mixer_norm + qkv proj + head-norm + RoPE
    outs = qkv_fused(hidden_states, residual, params["pre_mixer_norm"],
                     params["qkv_proj"], params["q_norm"], params["k_norm"],
                     cos_tab, sin_tab, mean_mat, rot_mat,
                     nh=NH, nkv=NKV, d=D, eps=eps, scale=D ** -0.5,
                     tm=tm, tk=tk_qkv)
    if residual is None:
        q, k, v = outs
        residual = hidden_states                       # residual stream (f32)
    else:
        q, k, v, residual = outs

    # 2) causal flash attention on lane-dense [T, NH*D] tensors (GQA in-kernel)
    attn = flash_attention(q, k, v, nh=NH, nkv=NKV, d=D, blk=blk_attn)

    # 3) fused o_proj (single K=NH*D matmul) + post_mixer_norm + residual add
    #    + pre_mlp_norm
    mlp_in, residual = oproj_fused(attn, params["o_proj"], residual,
                                   params["post_mixer_norm"],
                                   params["pre_mlp_norm"], eps=eps, tm=tm)

    # 4) fused merged gate/up + SiLU-mul + down + post_mlp_norm
    hidden_states = mlp_fused(mlp_in, params["gate_proj"], params["up_proj"],
                              params["down_proj"], params["post_mlp_norm"],
                              eps=eps, tm=tm, ti=ti_mlp)
    return hidden_states, residual


# ------------------------- pure-JAX reference -------------------------------
def _reference_layer(params, positions, x, residual, cfg):
    eps = cfg.rms_norm_eps
    T, H = x.shape
    NH, NKV, D = (cfg.num_attention_heads, cfg.num_key_value_heads,
                  cfg.hidden_size_per_head)
    f32 = lambda a: a.astype(jnp.float32)

    def rms(v, w):
        var = jnp.mean(v * v, axis=-1, keepdims=True)
        return v * lax.rsqrt(var + eps) * w

    if residual is None:
        residual = x
        h = rms(x, params["pre_mixer_norm"])
    else:
        residual = x + residual
        h = rms(residual, params["pre_mixer_norm"])

    qkv = h @ f32(params["qkv_proj"])
    q = rms(qkv[:, :NH * D].reshape(T, NH, D), params["q_norm"])
    k = rms(qkv[:, NH * D:(NH + NKV) * D].reshape(T, NKV, D), params["k_norm"])
    v = qkv[:, (NH + NKV) * D:].reshape(T, NKV, D)

    inv_freq = 1.0 / (cfg.rope_theta ** (jnp.arange(0, D, 2, dtype=jnp.float32) / D))
    freqs = positions.astype(jnp.float32)[:, None] * inv_freq[None, :]
    cos, sin = jnp.cos(freqs)[:, None, :], jnp.sin(freqs)[:, None, :]

    def rot(t):
        d2 = D // 2
        t1, t2 = t[..., :d2], t[..., d2:]
        return jnp.concatenate([t1 * cos - t2 * sin, t2 * cos + t1 * sin], -1)

    q, k = rot(q), rot(k)
    group = NH // NKV
    k_rep = jnp.repeat(k, group, axis=1)
    v_rep = jnp.repeat(v, group, axis=1)
    s = jnp.einsum("tnd,snd->nts", q, k_rep) * (D ** -0.5)
    mask = jnp.tril(jnp.ones((T, T), bool))
    s = jnp.where(mask[None], s, -jnp.inf)
    p = jax.nn.softmax(s, axis=-1)
    o = jnp.einsum("nts,snd->tnd", p, v_rep).reshape(T, NH * D)

    h = o @ f32(params["o_proj"])
    h = rms(h, params["post_mixer_norm"])
    residual = h + residual
    h = rms(residual, params["pre_mlp_norm"])
    g = h @ f32(params["gate_proj"])
    u = h @ f32(params["up_proj"])
    h = (g * jax.nn.sigmoid(g) * u) @ f32(params["down_proj"])
    h = rms(h, params["post_mlp_norm"])
    return h, residual


# ------------------------------ params -------------------------------------
def init_params(key, cfg):
    H, D = cfg.hidden_size, cfg.hidden_size_per_head
    NH, NKV, inter = (cfg.num_attention_heads, cfg.num_key_value_heads,
                      cfg.intermediate_size)
    ks = jax.random.split(key, 11)
    w = lambda k, shape: 0.02 * jax.random.normal(k, shape, dtype=jnp.float32)
    nw = lambda k, shape: 1.0 + 0.1 * jax.random.normal(k, shape, dtype=jnp.float32)
    return {
        # projection weights stored bf16 (MXU-native, halves weight HBM traffic)
        "qkv_proj": w(ks[0], (H, (NH + 2 * NKV) * D)).astype(jnp.bfloat16),
        "o_proj": w(ks[1], (NH * D, H)).astype(jnp.bfloat16),   # single K matmul
        "gate_proj": w(ks[2], (H, inter)).astype(jnp.bfloat16),
        "up_proj": w(ks[3], (H, inter)).astype(jnp.bfloat16),
        "down_proj": w(ks[4], (inter, H)).astype(jnp.bfloat16),
        # norm weights stay f32
        "q_norm": nw(ks[5], (NH, D)),
        "k_norm": nw(ks[6], (NKV, D)),
        "pre_mixer_norm": nw(ks[7], (H,)),
        "post_mixer_norm": nw(ks[8], (H,)),
        "pre_mlp_norm": nw(ks[9], (H,)),
        "post_mlp_norm": nw(ks[10], (H,)),
    }


# ------------------------------- main ---------------------------------------
if __name__ == "__main__":
    cfg = Cfg()
    layer_idx = 1
    assert not is_mamba(cfg, layer_idx)   # this layer index -> attention mixer

    key = jax.random.PRNGKey(0)
    k_param, k_x = jax.random.split(key)
    params = init_params(k_param, cfg)

    T = 16
    positions = jnp.arange(T, dtype=jnp.int32)
    hidden_states = jax.random.normal(k_x, (T, cfg.hidden_size), dtype=jnp.float32)

    layer = functools.partial(plamo2_decoder_layer, cfg=cfg)

    # case 1: residual is None (first decoder layer)
    out1, res1 = layer(params, positions, hidden_states, None)

    # case 2: exercises the fused residual-add path
    k_x2, k_r2 = jax.random.split(k_x)
    hidden_states2 = jax.random.normal(k_x2, (T, cfg.hidden_size), jnp.float32)
    residual2 = jax.random.normal(k_r2, (T, cfg.hidden_size), jnp.float32)
    out2, res2 = layer(params, positions, hidden_states2, residual2)

    out1, res1, out2, res2 = jax.block_until_ready((out1, res1, out2, res2))

    r_out1, r_res1 = _reference_layer(params, positions, hidden_states, None, cfg)
    r_out2, r_res2 = _reference_layer(params, positions, hidden_states2,
                                      residual2, cfg)

    # kernels use bf16 MXU operands for the projections; reference is f32.
    tol = dict(rtol=3e-2, atol=3e-2)
    assert jnp.allclose(out1, r_out1, **tol), "output mismatch (residual=None)"
    assert jnp.allclose(res1, r_res1, **tol), "residual mismatch (residual=None)"
    assert jnp.allclose(out2, r_out2, **tol), "output mismatch (fused residual)"
    assert jnp.allclose(res2, r_res2, **tol), "residual mismatch (fused residual)"

    print("KERNEL_OK")
</pallas_src>

<mosaic_0001>
module attributes {stable_mosaic.version = 11 : i64} {
  func.func @_qkv_fused_kernel(%arg0: i32, %arg1: i32, %arg2: memref<8x128xf32, #tpu.memory_space<vmem>>, %arg3: memref<1x128xf32, #tpu.memory_space<vmem>>, %arg4: memref<128x192xbf16, #tpu.memory_space<vmem>>, %arg5: memref<128x64xbf16, #tpu.memory_space<vmem>>, %arg6: memref<1x192xf32, #tpu.memory_space<vmem>>, %arg7: memref<8x192xf32, #tpu.memory_space<vmem>>, %arg8: memref<8x192xf32, #tpu.memory_space<vmem>>, %arg9: memref<192x192xf32, #tpu.memory_space<vmem>>, %arg10: memref<192x192xf32, #tpu.memory_space<vmem>>, %arg11: memref<8x128xbf16, #tpu.memory_space<vmem>>, %arg12: memref<8x64xbf16, #tpu.memory_space<vmem>>, %arg13: memref<8x64xbf16, #tpu.memory_space<vmem>>, %arg14: memref<8x128xbf16, #tpu.memory_space<vmem>>, %arg15: memref<8x192xf32, #tpu.memory_space<vmem>>, %arg16: memref<8x64xf32, #tpu.memory_space<vmem>>) attributes {dimension_semantics = [#tpu.dimension_semantics<parallel>, #tpu.dimension_semantics<arbitrary>], iteration_bounds = array<i64: 2, 1>, scalar_prefetch = 0 : i64, scratch_operands = 3 : i64, tpu.core_type = #tpu.core_type<tc>, window_params = [{transform_indices = @transform_0, window_bounds = array<i64: 8, 128>}, {pipeline_mode = #tpu.pipeline_mode<synchronous>, transform_indices = @transform_1, window_bounds = array<i64: 1, 128>}, {transform_indices = @transform_2, window_bounds = array<i64: 128, 192>}, {transform_indices = @transform_3, window_bounds = array<i64: 128, 64>}, {pipeline_mode = #tpu.pipeline_mode<synchronous>, transform_indices = @transform_4, window_bounds = array<i64: 1, 192>}, {transform_indices = @transform_5, window_bounds = array<i64: 8, 192>}, {transform_indices = @transform_6, window_bounds = array<i64: 8, 192>}, {pipeline_mode = #tpu.pipeline_mode<synchronous>, transform_indices = @transform_7, window_bounds = array<i64: 192, 192>}, {pipeline_mode = #tpu.pipeline_mode<synchronous>, transform_indices = @transform_8, window_bounds = array<i64: 192, 192>}, {transform_indices = @transform_9, window_bounds = array<i64: 8, 128>}, {transform_indices = @transform_10, window_bounds = array<i64: 8, 64>}, {transform_indices = @transform_11, window_bounds = array<i64: 8, 64>}]} {
    %c0_i32 = arith.constant 0 : i32
    %0 = arith.cmpi eq, %arg1, %c0_i32 : i32
    %1 = arith.extui %0 : i1 to i32
    %c0_i32_0 = arith.constant 0 : i32
    %2 = arith.cmpi ne, %1, %c0_i32_0 : i32
    scf.if %2 {
      %c0_17 = arith.constant 0 : index
      %c0_18 = arith.constant 0 : index
      %17 = vector.load %arg2[%c0_17, %c0_18] : memref<8x128xf32, #tpu.memory_space<vmem>>, vector<8x128xf32>
      %18 = arith.mulf %17, %17 : vector<8x128xf32>
      %cst_19 = arith.constant dense<0.000000e+00> : vector<8xf32>
      %19 = vector.multi_reduction <add>, %18, %cst_19 [1] : vector<8x128xf32> to vector<8xf32>
      %20 = vector.shape_cast %19 : vector<8xf32> to vector<8x1xf32>
      %cst_20 = arith.constant 1.280000e+02 : f32
      %21 = vector.broadcast %cst_20 : f32 to vector<8x1xf32>
      %22 = arith.divf %20, %21 : vector<8x1xf32>
      %cst_21 = arith.constant 9.99999997E-7 : f32
      %23 = vector.broadcast %cst_21 : f32 to vector<8x1xf32>
      %24 = arith.addf %22, %23 : vector<8x1xf32>
      %25 = math.rsqrt %24 : vector<8x1xf32>
      %26 = vector.broadcast %25 : vector<8x1xf32> to vector<8x128xf32>
      %27 = arith.mulf %17, %26 : vector<8x128xf32>
      %c0_22 = arith.constant 0 : index
      %c0_23 = arith.constant 0 : index
      %28 = vector.load %arg3[%c0_22, %c0_23] : memref<1x128xf32, #tpu.memory_space<vmem>>, vector<1x128xf32>
      %29 = vector.broadcast %28 : vector<1x128xf32> to vector<8x128xf32>
      %30 = arith.mulf %27, %29 : vector<8x128xf32>
      %31 = arith.truncf %30 : vector<8x128xf32> to vector<8x128xbf16>
      %c0_24 = arith.constant 0 : index
      %c0_25 = arith.constant 0 : index
      %32 = vector.load %arg14[%c0_24, %c0_25] : memref<8x128xbf16, #tpu.memory_space<vmem>>, vector<8x128xbf16>
      tpu.vector_store %arg14[%c0_24, %c0_25], %31 {strides = array<i32>} : memref<8x128xbf16, #tpu.memory_space<vmem>>, vector<8x128xbf16>,
      %cst_26 = arith.constant 0.000000e+00 : f32
      %33 = vector.broadcast %cst_26 : f32 to vector<8x192xf32>
      %c0_27 = arith.constant 0 : index
      %c0_28 = arith.constant 0 : index
      %34 = vector.load %arg15[%c0_27, %c0_28] : memref<8x192xf32, #tpu.memory_space<vmem>>, vector<8x192xf32>
      tpu.vector_store %arg15[%c0_27, %c0_28], %33 {strides = array<i32>} : memref<8x192xf32, #tpu.memory_space<vmem>>, vector<8x192xf32>,
      %cst_29 = arith.constant 0.000000e+00 : f32
      %35 = vector.broadcast %cst_29 : f32 to vector<8x64xf32>
      %c0_30 = arith.constant 0 : index
      %c0_31 = arith.constant 0 : index
      %36 = vector.load %arg16[%c0_30, %c0_31] : memref<8x64xf32, #tpu.memory_space<vmem>>, vector<8x64xf32>
      tpu.vector_store %arg16[%c0_30, %c0_31], %35 {strides = array<i32>} : memref<8x64xf32, #tpu.memory_space<vmem>>, vector<8x64xf32>,
    } else {
    }
    %c0 = arith.constant 0 : index
    %c0_1 = arith.constant 0 : index
    %3 = vector.load %arg14[%c0, %c0_1] : memref<8x128xbf16, #tpu.memory_space<vmem>>, vector<8x128xbf16>
    %c0_2 = arith.constant 0 : index
    %c0_3 = arith.constant 0 : index
    %4 = vector.load %arg15[%c0_2, %c0_3] : memref<8x192xf32, #tpu.memory_space<vmem>>, vector<8x192xf32>
    %c0_4 = arith.constant 0 : index
    %c0_5 = arith.constant 0 : index
    %5 = vector.load %arg4[%c0_4, %c0_5] : memref<128x192xbf16, #tpu.memory_space<vmem>>, vector<128x192xbf16>
    %cst = arith.constant dense<0.000000e+00> : vector<8x192xf32>
    %6 = tpu.matmul %3, %5, %cst {dimension_numbers = #tpu.dot_dimension_numbers<[1], [0], [0], [1], [0, 0, 1, 1], [], []>} : vector<8x128xbf16>, vector<128x192xbf16>, vector<8x192xf32> -> vector<8x192xf32>
    %7 = arith.addf %4, %6 : vector<8x192xf32>
    %c0_6 = arith.constant 0 : index
    %c0_7 = arith.constant 0 : index
    %8 = vector.load %arg15[%c0_6, %c0_7] : memref<8x192xf32, #tpu.memory_space<vmem>>, vector<8x192xf32>
    tpu.vector_store %arg15[%c0_6, %c0_7], %7 {strides = array<i32>} : memref<8x192xf32, #tpu.memory_space<vmem>>, vector<8x192xf32>,
    %c0_8 = arith.constant 0 : index
    %c0_9 = arith.constant 0 : index
    %9 = vector.load %arg16[%c0_8, %c0_9] : memref<8x64xf32, #tpu.memory_space<vmem>>, vector<8x64xf32>
    %c0_10 = arith.constant 0 : index
    %c0_11 = arith.constant 0 : index
    %10 = vector.load %arg5[%c0_10, %c0_11] : memref<128x64xbf16, #tpu.memory_space<vmem>>, vector<128x64xbf16>
    %cst_12 = arith.constant dense<0.000000e+00> : vector<8x64xf32>
    %11 = tpu.matmul %3, %10, %cst_12 {dimension_numbers = #tpu.dot_dimension_numbers<[1], [0], [0], [1], [0, 0, 1, 1], [], []>} : vector<8x128xbf16>, vector<128x64xbf16>, vector<8x64xf32> -> vector<8x64xf32>
    %12 = arith.addf %9, %11 : vector<8x64xf32>
    %c0_13 = arith.constant 0 : index
    %c0_14 = arith.constant 0 : index
    %13 = vector.load %arg16[%c0_13, %c0_14] : memref<8x64xf32, #tpu.memory_space<vmem>>, vector<8x64xf32>
    tpu.vector_store %arg16[%c0_13, %c0_14], %12 {strides = array<i32>} : memref<8x64xf32, #tpu.memory_space<vmem>>, vector<8x64xf32>,
    %c0_i32_15 = arith.constant 0 : i32
    %14 = arith.cmpi eq, %arg1, %c0_i32_15 : i32
    %15 = arith.extui %14 : i1 to i32
    %c0_i32_16 = arith.constant 0 : i32
    %16 = arith.cmpi ne, %15, %c0_i32_16 : i32
    scf.if %16 {
      %c0_17 = arith.constant 0 : index
      %c0_18 = arith.constant 0 : index
      %17 = vector.load %arg15[%c0_17, %c0_18] : memref<8x192xf32, #tpu.memory_space<vmem>>, vector<8x192xf32>
      %18 = arith.mulf %17, %17 : vector<8x192xf32>
      %c0_19 = arith.constant 0 : index
      %c0_20 = arith.constant 0 : index
      %19 = vector.load %arg9[%c0_19, %c0_20] : memref<192x192xf32, #tpu.memory_space<vmem>>, vector<192x192xf32>
      %cst_21 = arith.constant dense<0.000000e+00> : vector<8x192xf32>
      %20 = tpu.matmul %18, %19, %cst_21 {dimension_numbers = #tpu.dot_dimension_numbers<[1], [0], [0], [1], [0, 0, 1, 1], [], []>} : vector<8x192xf32>, vector<192x192xf32>, vector<8x192xf32> -> vector<8x192xf32>
      %cst_22 = arith.constant 9.99999997E-7 : f32
      %21 = vector.broadcast %cst_22 : f32 to vector<8x192xf32>
      %22 = arith.addf %20, %21 : vector<8x192xf32>
      %23 = math.rsqrt %22 : vector<8x192xf32>
      %24 = arith.mulf %17, %23 : vector<8x192xf32>
      %c0_23 = arith.constant 0 : index
      %c0_24 = arith.constant 0 : index
      %25 = vector.load %arg6[%c0_23, %c0_24] : memref<1x192xf32, #tpu.memory_space<vmem>>, vector<1x192xf32>
      %26 = vector.broadcast %25 : vector<1x192xf32> to vector<8x192xf32>
      %27 = arith.mulf %24, %26 : vector<8x192xf32>
      %c0_25 = arith.constant 0 : index
      %c0_26 = arith.constant 0 : index
      %28 = vector.load %arg10[%c0_25, %c0_26] : memref<192x192xf32, #tpu.memory_space<vmem>>, vector<192x192xf32>
      %cst_27 = arith.constant dense<0.000000e+00> : vector<8x192xf32>
      %29 = tpu.matmul %27, %28, %cst_27 {dimension_numbers = #tpu.dot_dimension_numbers<[1], [0], [0], [1], [0, 0, 1, 1], [], []>} : vector<8x192xf32>, vector<192x192xf32>, vector<8x192xf32> -> vector<8x192xf32>
      %c0_28 = arith.constant 0 : index
      %c0_29 = arith.constant 0 : index
      %30 = vector.load %arg7[%c0_28, %c0_29] : memref<8x192xf32, #tpu.memory_space<vmem>>, vector<8x192xf32>
      %31 = arith.mulf %27, %30 : vector<8x192xf32>
      %c0_30 = arith.constant 0 : index
      %c0_31 = arith.constant 0 : index
      %32 = vector.load %arg8[%c0_30, %c0_31] : memref<8x192xf32, #tpu.memory_space<vmem>>, vector<8x192xf32>
      %33 = arith.mulf %29, %32 : vector<8x192xf32>
      %34 = arith.addf %31, %33 : vector<8x192xf32>
      %35 = vector.extract_strided_slice %34 {offsets = [0, 0], sizes = [8, 128], strides = [1, 1]} : vector<8x192xf32> to vector<8x128xf32>
      %cst_32 = arith.constant 0.176776692 : f32
      %36 = vector.broadcast %cst_32 : f32 to vector<8x128xf32>
      %37 = arith.mulf %35, %36 : vector<8x128xf32>
      %38 = arith.truncf %37 : vector<8x128xf32> to vector<8x128xbf16>
      %c0_33 = arith.constant 0 : index
      %c0_34 = arith.constant 0 : index
      %39 = vector.load %arg11[%c0_33, %c0_34] : memref<8x128xbf16, #tpu.memory_space<vmem>>, vector<8x128xbf16>
      tpu.vector_store %arg11[%c0_33, %c0_34], %38 {strides = array<i32>} : memref<8x128xbf16, #tpu.memory_space<vmem>>, vector<8x128xbf16>,
      %40 = vector.extract_strided_slice %34 {offsets = [0, 128], sizes = [8, 64], strides = [1, 1]} : vector<8x192xf32> to vector<8x64xf32>
      %41 = arith.truncf %40 : vector<8x64xf32> to vector<8x64xbf16>
      %c0_35 = arith.constant 0 : index
      %c0_36 = arith.constant 0 : index
      %42 = vector.load %arg12[%c0_35, %c0_36] : memref<8x64xbf16, #tpu.memory_space<vmem>>, vector<8x64xbf16>
      tpu.vector_store %arg12[%c0_35, %c0_36], %41 {strides = array<i32>} : memref<8x64xbf16, #tpu.memory_space<vmem>>, vector<8x64xbf16>,
      %c0_37 = arith.constant 0 : index
      %c0_38 = arith.constant 0 : index
      %43 = vector.load %arg16[%c0_37, %c0_38] : memref<8x64xf32, #tpu.memory_space<vmem>>, vector<8x64xf32>
      %44 = arith.truncf %43 : vector<8x64xf32> to vector<8x64xbf16>
      %c0_39 = arith.constant 0 : index
      %c0_40 = arith.constant 0 : index
      %45 = vector.load %arg13[%c0_39, %c0_40] : memref<8x64xbf16, #tpu.memory_space<vmem>>, vector<8x64xbf16>
      tpu.vector_store %arg13[%c0_39, %c0_40], %44 {strides = array<i32>} : memref<8x64xbf16, #tpu.memory_space<vmem>>, vector<8x64xbf16>,
    } else {
    }
    return
  }
  func.func @transform_0(%arg0: i32, %arg1: i32) -> (i32, i32) {
    %c0_i32 = arith.constant 0 : i32
    %c0_i32_0 = arith.constant 0 : i32
    return %arg0, %c0_i32 : i32, i32
  }
  func.func @transform_1(%arg0: i32, %arg1: i32) -> (i32, i32) {
    %c0_i32 = arith.constant 0 : i32
    %c0_i32_0 = arith.constant 0 : i32
    %c0_i32_1 = arith.constant 0 : i32
    return %c0_i32, %c0_i32_0 : i32, i32
  }
  func.func @transform_2(%arg0: i32, %arg1: i32) -> (i32, i32) {
    %c0_i32 = arith.constant 0 : i32
    %c0_i32_0 = arith.constant 0 : i32
    return %arg1, %c0_i32 : i32, i32
  }
  func.func @transform_3(%arg0: i32, %arg1: i32) -> (i32, i32) {
    %c0_i32 = arith.constant 0 : i32
    %c0_i32_0 = arith.constant 0 : i32
    return %arg1, %c0_i32 : i32, i32
  }
  func.func @transform_4(%arg0: i32, %arg1: i32) -> (i32, i32) {
    %c0_i32 = arith.constant 0 : i32
    %c0_i32_0 = arith.constant 0 : i32
    %c0_i32_1 = arith.constant 0 : i32
    return %c0_i32, %c0_i32_0 : i32, i32
  }
  func.func @transform_5(%arg0: i32, %arg1: i32) -> (i32, i32) {
    %c0_i32 = arith.constant 0 : i32
    %c0_i32_0 = arith.constant 0 : i32
    return %arg0, %c0_i32 : i32, i32
  }
  func.func @transform_6(%arg0: i32, %arg1: i32) -> (i32, i32) {
    %c0_i32 = arith.constant 0 : i32
    %c0_i32_0 = arith.constant 0 : i32
    return %arg0, %c0_i32 : i32, i32
  }
  func.func @transform_7(%arg0: i32, %arg1: i32) -> (i32, i32) {
    %c0_i32 = arith.constant 0 : i32
    %c0_i32_0 = arith.constant 0 : i32
    %c0_i32_1 = arith.constant 0 : i32
    return %c0_i32, %c0_i32_0 : i32, i32
  }
  func.func @transform_8(%arg0: i32, %arg1: i32) -> (i32, i32) {
    %c0_i32 = arith.constant 0 : i32
    %c0_i32_0 = arith.constant 0 : i32
    %c0_i32_1 = arith.constant 0 : i32
    return %c0_i32, %c0_i32_0 : i32, i32
  }
  func.func @transform_9(%arg0: i32, %arg1: i32) -> (i32, i32) {
    %c0_i32 = arith.constant 0 : i32
    %c0_i32_0 = arith.constant 0 : i32
    return %arg0, %c0_i32 : i32, i32
  }
  func.func @transform_10(%arg0: i32, %arg1: i32) -> (i32, i32) {
    %c0_i32 = arith.constant 0 : i32
    %c0_i32_0 = arith.constant 0 : i32
    return %arg0, %c0_i32 : i32, i32
  }
  func.func @transform_11(%arg0: i32, %arg1: i32) -> (i32, i32) {
    %c0_i32 = arith.constant 0 : i32
    %c0_i32_0 = arith.constant 0 : i32
    return %arg0, %c0_i32 : i32, i32
  }
}

</mosaic_0001>

<llo_original>
// kernel: tpu_custom_call.1
$region0: #{tpu_custom_call.1}
  #allocation0 [shape = 'u32[]', space=smem, size = 0x4, offset = 0x4, fixed_abs, tag = 'smem constant byte address 0x4 - core index']
  #allocation1 [shape = 'u32[72,128]{1,0:T(1,128)}', space=vmem, size = 0x9000, scoped, tag = 'internal scratch']
  #allocation2 [shape = 'bf16[8,128]{1,0:T(8,128)(2,1)}', space=vmem, size = 0x800, scoped, tag = 'scratch operand']
  #allocation3 [shape = 'f32[8,192]{1,0:T(8,128)}', space=vmem, size = 0x2000, scoped, tag = 'scratch operand']
  #allocation4 [shape = 'f32[8,64]{1,0:T(8,128)}', space=vmem, size = 0x1000, scoped, tag = 'scratch operand']
  %s0 = inlined_call_operand.vmem [shape: f32[16,128], index: 0, kind: input, shape index: {}]
  %s1 = inlined_call_operand.vmem [shape: f32[1,128], index: 1, kind: input, shape index: {}]
  %s2 = inlined_call_operand.vmem [shape: bf16[128,192], index: 2, kind: input, shape index: {}]
  %s3 = inlined_call_operand.vmem [shape: bf16[128,64], index: 3, kind: input, shape index: {}]
  %s4 = inlined_call_operand.vmem [shape: f32[1,192], index: 4, kind: input, shape index: {}]
  %s5 = inlined_call_operand.vmem [shape: f32[16,192], index: 5, kind: input, shape index: {}]
  %s6 = inlined_call_operand.vmem [shape: f32[16,192], index: 6, kind: input, shape index: {}]
  %s7 = inlined_call_operand.hbm [shape: f32[192,192], index: 7, kind: input, shape index: {}]
  %s8 = inlined_call_operand.hbm [shape: f32[192,192], index: 8, kind: input, shape index: {}]
  %s9 = inlined_call_operand.hbm [shape: bf16[16,128], index: 9, kind: output, shape index: {0}]
  %s10 = inlined_call_operand.hbm [shape: bf16[16,64], index: 10, kind: output, shape index: {1}]
  %s11 = inlined_call_operand.hbm [shape: bf16[16,64], index: 11, kind: output, shape index: {2}]
  %12 = xla_tuple %s9, %s10, %s11
  %s13 = sld [smem:[#allocation0]]
  $region101: #{tpu_custom_call.1} parent=0
    _
  %s15 = ssub.s32 1, %s13
  %s16 = scalar_select 0, %s15, %s13
  $region1: #{tpu_custom_call.1} parent=0
    #allocation5 [shape = 'u8[196608]{0}', space=vmem, size = 0x30000, scoped, tag = 'input window, operand 7, single buffered']
    #allocation6 [shape = 's32[2]{0}', space=sflag, size = 0x8, scoped, tag = 'scoped memory for tpu_custom_call.1']
    #allocation7 [shape = 's32[2]{0}', space=sflag, size = 0x8, scoped, tag = 'scoped memory for tpu_custom_call.1']
    #allocation8 [shape = 'u8[196608]{0}', space=vmem, size = 0x30000, scoped, tag = 'input window, operand 8, single buffered']
    #allocation9 [shape = 's32[1]{0}', space=sflag, size = 0x4, scoped, tag = 'scoped memory for tpu_custom_call.1']
    #allocation10 [shape = 'u8[4096]{0}', space=vmem, size = 0x1000, scoped, tag = 'output window, operand 0']
    #allocation11 [shape = 'u8[4096]{0}', space=vmem, size = 0x1000, scoped, tag = 'output window, operand 1']
    #allocation12 [shape = 's32[2]{0}', space=sflag, size = 0x8, scoped, tag = 'scoped memory for tpu_custom_call.1']
    #allocation13 [shape = 'u8[4096]{0}', space=vmem, size = 0x1000, scoped, tag = 'output window, operand 2']
    %17 = vsyncpa [#allocation6], 0
    %18 = vsyncpa [#allocation9], 0
    %19 = vsyncpa [#allocation7], 0
    %s20 = scalar_lea.sflag [#allocation7], 1
    %21 = vsyncpa %s20, 0
    %22 = vsyncpa [#allocation12], 0
    %s23 = scalar_lea.sflag [#allocation12], 1
    %24 = vsyncpa %s23, 0
    loop: start=0, step=1, limit=4
    $region2: #{tpu_custom_call.1} parent=1 // loop_pre_header
      _
    $region3: #{tpu_custom_call.1} parent=1 // loop_header
      %s26 = sphi 0, %s30
      %p27 = scmp.ge.s32.totalorder %s26, 4
      %s33 = sphi 0, %s45
      %s34 = sphi 0, %s41
      %s35 = sphi 0, %s33
      %s36 = sphi 0, %s34
      %s37 = sphi 0, %s35
      %s38 = sphi 0, %s36
      %s48 = sphi 0, %s50
      %s51 = sphi 0, %s48
      %s52 = sphi 0, %s51
      %s68 = sphi 0, %s52
      %s72 = sphi 0, %s72
      %s74 = sphi 0, %s72
      %s75 = sphi 0, %s74
      %s89 = sphi 0, %s75
      %s95 = sphi 0, %s97
      %s98 = sphi 0, %s95
      %s99 = sphi 0, %s98
      %s115 = sphi 0, %s99
      %s121 = sphi 0, %s123
      %s124 = sphi 0, %s121
      %s125 = sphi 0, %s124
      %s141 = sphi 0, %s125
      %s145 = sphi 0, %s145
      %s147 = sphi 0, %s145
      %s148 = sphi 0, %s147
      %s162 = sphi 0, %s148
      %s168 = sphi 0, %s170
      %s171 = sphi 0, %s168
      %s172 = sphi 0, %s171
      %s188 = sphi 0, %s172
      %s194 = sphi 0, %s196
      %s197 = sphi 0, %s194
      %s198 = sphi 0, %s197
      %s214 = sphi 0, %s198
      %s218 = sphi 0, %s218
      %s220 = sphi 0, %s218
      %s221 = sphi 0, %s220
      %s235 = sphi 0, %s221
      %s239 = sphi 0, %s239
      %s241 = sphi 0, %s239
      %s242 = sphi 0, %s241
      %s256 = sphi 0, %s242
      %s262 = sphi 0, %s264
      %s265 = sphi 0, %s262
      %s266 = sphi 0, %s265
      %s282 = sphi 0, %s266
      %s288 = sphi 0, %s290
      %s291 = sphi 0, %s288
      %s292 = sphi 0, %s291
      %s308 = sphi 0, %s292
      %s314 = sphi 0, %s316
      %s317 = sphi 0, %s314
      %s318 = sphi 0, %s317
      %s334 = sphi 0, %s318
    $region4: #{tpu_custom_call.1} parent=1 // loop_header_branch
      %29 = sbr.rel (%p27) target = $region8
    $region5: #{tpu_custom_call.1} parent=1 // loop_body
      %s31 = ssub.s32 %s26, 1
      %s32 = ssub.s32 %s26, 2
      %s39 = sadd.s32 1, %s34
      %p40 = scmp.ge.s32.totalorder %s39, 1
      %s41 = scalar_select %p40, 0, %s39
      %s42 = sadd.s32 1, %s33
      %s43 = scalar_select %p40, %s42, %s33
      %p44 = scmp.ge.s32.totalorder %s43, 2
      %s45 = scalar_select %p44, 0, %s43
      %s46 = ssub.s32 %s33, %s45
      %p47 = scmp.eq.s32.totalorder %s46, 0
      %s49 = sadd.s32 %s48, 1
      %s50 = scalar_select %p47, %s48, %s49
      %p53 = pneg %p47
      %p54 = scmp.eq.s32.totalorder %s26, 1
      %p55 = por %p53, %p54
      %p56 = scmp.ne.s32.totalorder %s48, %s51
      %p57 = scmp.eq.s32.totalorder %s26, 0
      %p58 = por %p56, %p57
      %p59 = scmp.ne.s32.totalorder %s48, %s51
      %p60 = scmp.eq.s32.totalorder %s31, 1
      %p61 = por %p59, %p60
      %p62 = scmp.ne.s32.totalorder %s51, %s52
      %p63 = scmp.eq.s32.totalorder %s31, 0
      %p64 = por %p62, %p63
      %p65 = scmp.ne.s32.totalorder %s51, %s52
      %p66 = scmp.eq.s32.totalorder %s32, 1
      %p67 = por %p65, %p66
      %p69 = scmp.ne.s32.totalorder %s52, %s68
      %p70 = scmp.eq.s32.totalorder %s32, 0
      %p71 = por %p69, %p70
      %s73 = sadd.s32 %s72, 1
      %p76 = scmp.eq.s32.totalorder %s26, 1
      %p77 = scmp.ne.s32.totalorder %s72, %s74
      %p78 = scmp.eq.s32.totalorder %s26, 0
      %p79 = por %p77, %p78
      %p80 = scmp.ne.s32.totalorder %s72, %s74
      %p81 = scmp.eq.s32.totalorder %s31, 1
      %p82 = por %p80, %p81
      %p83 = scmp.ne.s32.totalorder %s74, %s75
      %p84 = scmp.eq.s32.totalorder %s31, 0
      %p85 = por %p83, %p84
      %p86 = scmp.ne.s32.totalorder %s74, %s75
      %p87 = scmp.eq.s32.totalorder %s32, 1
      %p88 = por %p86, %p87
      %p90 = scmp.ne.s32.totalorder %s75, %s89
      %p91 = scmp.eq.s32.totalorder %s32, 0
      %p92 = por %p90, %p91
      %s93 = ssub.s32 %s34, %s41
      %p94 = scmp.eq.s32.totalorder %s93, 0
      %s96 = sadd.s32 %s95, 1
      %s97 = scalar_select %p94, %s95, %s96
      %p100 = pneg %p94
      %p101 = scmp.eq.s32.totalorder %s26, 1
      %p102 = por %p100, %p101
      %p103 = scmp.ne.s32.totalorder %s95, %s98
      %p104 = scmp.eq.s32.totalorder %s26, 0
      %p105 = por %p103, %p104
      %p106 = scmp.ne.s32.totalorder %s95, %s98
      %p107 = scmp.eq.s32.totalorder %s31, 1
      %p108 = por %p106, %p107
      %p109 = scmp.ne.s32.totalorder %s98, %s99
      %p110 = scmp.eq.s32.totalorder %s31, 0
      %p111 = por %p109, %p110
      %p112 = scmp.ne.s32.totalorder %s98, %s99
      %p113 = scmp.eq.s32.totalorder %s32, 1
      %p114 = por %p112, %p113
      %p116 = scmp.ne.s32.totalorder %s99, %s115
      %p117 = scmp.eq.s32.totalorder %s32, 0
      %p118 = por %p116, %p117
      %s119 = ssub.s32 %s34, %s41
      %p120 = scmp.eq.s32.totalorder %s119, 0
      %s122 = sadd.s32 %s121, 1
      %s123 = scalar_select %p120, %s121, %s122
      %p126 = pneg %p120
      %p127 = scmp.eq.s32.totalorder %s26, 1
      %p128 = por %p126, %p127
      %p129 = scmp.ne.s32.totalorder %s121, %s124
      %p130 = scmp.eq.s32.totalorder %s26, 0
      %p131 = por %p129, %p130
      %p132 = scmp.ne.s32.totalorder %s121, %s124
      %p133 = scmp.eq.s32.totalorder %s31, 1
      %p134 = por %p132, %p133
      %p135 = scmp.ne.s32.totalorder %s124, %s125
      %p136 = scmp.eq.s32.totalorder %s31, 0
      %p137 = por %p135, %p136
      %p138 = scmp.ne.s32.totalorder %s124, %s125
      %p139 = scmp.eq.s32.totalorder %s32, 1
      %p140 = por %p138, %p139
      %p142 = scmp.ne.s32.totalorder %s125, %s141
      %p143 = scmp.eq.s32.totalorder %s32, 0
      %p144 = por %p142, %p143
      %s146 = sadd.s32 %s145, 1
      %p149 = scmp.eq.s32.totalorder %s26, 1
      %p150 = scmp.ne.s32.totalorder %s145, %s147
      %p151 = scmp.eq.s32.totalorder %s26, 0
      %p152 = por %p150, %p151
      %p153 = scmp.ne.s32.totalorder %s145, %s147
      %p154 = scmp.eq.s32.totalorder %s31, 1
      %p155 = por %p153, %p154
      %p156 = scmp.ne.s32.totalorder %s147, %s148
      %p157 = scmp.eq.s32.totalorder %s31, 0
      %p158 = por %p156, %p157
      %p159 = scmp.ne.s32.totalorder %s147, %s148
      %p160 = scmp.eq.s32.totalorder %s32, 1
      %p161 = por %p159, %p160
      %p163 = scmp.ne.s32.totalorder %s148, %s162
      %p164 = scmp.eq.s32.totalorder %s32, 0
      %p165 = por %p163, %p164
      %s166 = ssub.s32 %s33, %s45
      %p167 = scmp.eq.s32.totalorder %s166, 0
      %s169 = sadd.s32 %s168, 1
      %s170 = scalar_select %p167, %s168, %s169
      %p173 = pneg %p167
      %p174 = scmp.eq.s32.totalorder %s26, 1
      %p175 = por %p173, %p174
      %p176 = scmp.ne.s32.totalorder %s168, %s171
      %p177 = scmp.eq.s32.totalorder %s26, 0
      %p178 = por %p176, %p177
      %p179 = scmp.ne.s32.totalorder %s168, %s171
      %p180 = scmp.eq.s32.totalorder %s31, 1
      %p181 = por %p179, %p180
      %p182 = scmp.ne.s32.totalorder %s171, %s172
      %p183 = scmp.eq.s32.totalorder %s31, 0
      %p184 = por %p182, %p183
      %p185 = scmp.ne.s32.totalorder %s171, %s172
      %p186 = scmp.eq.s32.totalorder %s32, 1
      %p187 = por %p185, %p186
      %p189 = scmp.ne.s32.totalorder %s172, %s188
      %p190 = scmp.eq.s32.totalorder %s32, 0
      %p191 = por %p189, %p190
      %s192 = ssub.s32 %s33, %s45
      %p193 = scmp.eq.s32.totalorder %s192, 0
      %s195 = sadd.s32 %s194, 1
      %s196 = scalar_select %p193, %s194, %s195
      %p199 = pneg %p193
      %p200 = scmp.eq.s32.totalorder %s26, 1
      %p201 = por %p199, %p200
      %p202 = scmp.ne.s32.totalorder %s194, %s197
      %p203 = scmp.eq.s32.totalorder %s26, 0
      %p204 = por %p202, %p203
      %p205 = scmp.ne.s32.totalorder %s194, %s197
      %p206 = scmp.eq.s32.totalorder %s31, 1
      %p207 = por %p205, %p206
      %p208 = scmp.ne.s32.totalorder %s197, %s198
      %p209 = scmp.eq.s32.totalorder %s31, 0
      %p210 = por %p208, %p209
      %p211 = scmp.ne.s32.totalorder %s197, %s198
      %p212 = scmp.eq.s32.totalorder %s32, 1
      %p213 = por %p211, %p212
      %p215 = scmp.ne.s32.totalorder %s198, %s214
      %p216 = scmp.eq.s32.totalorder %s32, 0
      %p217 = por %p215, %p216
      %s219 = sadd.s32 %s218, 1
      %p222 = scmp.eq.s32.totalorder %s26, 1
      %p223 = scmp.ne.s32.totalorder %s218, %s220
      %p224 = scmp.eq.s32.totalorder %s26, 0
      %p225 = por %p223, %p224
      %p226 = scmp.ne.s32.totalorder %s218, %s220
      %p227 = scmp.eq.s32.totalorder %s31, 1
      %p228 = por %p226, %p227
      %p229 = scmp.ne.s32.totalorder %s220, %s221
      %p230 = scmp.eq.s32.totalorder %s31, 0
      %p231 = por %p229, %p230
      %p232 = scmp.ne.s32.totalorder %s220, %s221
      %p233 = scmp.eq.s32.totalorder %s32, 1
      %p234 = por %p232, %p233
      %p236 = scmp.ne.s32.totalorder %s221, %s235
      %p237 = scmp.eq.s32.totalorder %s32, 0
      %p238 = por %p236, %p237
      %s240 = sadd.s32 %s239, 1
      %p243 = scmp.eq.s32.totalorder %s26, 1
      %p244 = scmp.ne.s32.totalorder %s239, %s241
      %p245 = scmp.eq.s32.totalorder %s26, 0
      %p246 = por %p244, %p245
      %p247 = scmp.ne.s32.totalorder %s239, %s241
      %p248 = scmp.eq.s32.totalorder %s31, 1
      %p249 = por %p247, %p248
      %p250 = scmp.ne.s32.totalorder %s241, %s242
      %p251 = scmp.eq.s32.totalorder %s31, 0
      %p252 = por %p250, %p251
      %p253 = scmp.ne.s32.totalorder %s241, %s242
      %p254 = scmp.eq.s32.totalorder %s32, 1
      %p255 = por %p253, %p254
      %p257 = scmp.ne.s32.totalorder %s242, %s256
      %p258 = scmp.eq.s32.totalorder %s32, 0
      %p259 = por %p257, %p258
      %s260 = ssub.s32 %s33, %s45
      %p261 = scmp.eq.s32.totalorder %s260, 0
      %s263 = sadd.s32 %s262, 1
      %s264 = scalar_select %p261, %s262, %s263
      %p267 = pneg %p261
      %p268 = scmp.eq.s32.totalorder %s26, 1
      %p269 = por %p267, %p268
      %p270 = scmp.ne.s32.totalorder %s262, %s265
      %p271 = scmp.eq.s32.totalorder %s26, 0
      %p272 = por %p270, %p271
      %p273 = scmp.ne.s32.totalorder %s262, %s265
      %p274 = scmp.eq.s32.totalorder %s31, 1
      %p275 = por %p273, %p274
      %p276 = scmp.ne.s32.totalorder %s265, %s266
      %p277 = scmp.eq.s32.totalorder %s31, 0
      %p278 = por %p276, %p277
      %p279 = scmp.ne.s32.totalorder %s265, %s266
      %p280 = scmp.eq.s32.totalorder %s32, 1
      %p281 = por %p279, %p280
      %p283 = scmp.ne.s32.totalorder %s266, %s282
      %p284 = scmp.eq.s32.totalorder %s32, 0
      %p285 = por %p283, %p284
      %s286 = ssub.s32 %s33, %s45
      %p287 = scmp.eq.s32.totalorder %s286, 0
      %s289 = sadd.s32 %s288, 1
      %s290 = scalar_select %p287, %s288, %s289
      %p293 = pneg %p287
      %p294 = scmp.eq.s32.totalorder %s26, 1
      %p295 = por %p293, %p294
      %p296 = scmp.ne.s32.totalorder %s288, %s291
      %p297 = scmp.eq.s32.totalorder %s26, 0
      %p298 = por %p296, %p297
      %p299 = scmp.ne.s32.totalorder %s288, %s291
      %p300 = scmp.eq.s32.totalorder %s31, 1
      %p301 = por %p299, %p300
      %p302 = scmp.ne.s32.totalorder %s291, %s292
      %p303 = scmp.eq.s32.totalorder %s31, 0
      %p304 = por %p302, %p303
      %p305 = scmp.ne.s32.totalorder %s291, %s292
      %p306 = scmp.eq.s32.totalorder %s32, 1
      %p307 = por %p305, %p306
      %p309 = scmp.ne.s32.totalorder %s292, %s308
      %p310 = scmp.eq.s32.totalorder %s32, 0
      %p311 = por %p309, %p310
      %s312 = ssub.s32 %s33, %s45
      %p313 = scmp.eq.s32.totalorder %s312, 0
      %s315 = sadd.s32 %s314, 1
      %s316 = scalar_select %p313, %s314, %s315
      %p319 = pneg %p313
      %p320 = scmp.eq.s32.totalorder %s26, 1
      %p321 = por %p319, %p320
      %p322 = scmp.ne.s32.totalorder %s314, %s317
      %p323 = scmp.eq.s32.totalorder %s26, 0
      %p324 = por %p322, %p323
      %p325 = scmp.ne.s32.totalorder %s314, %s317
      %p326 = scmp.eq.s32.totalorder %s31, 1
      %p327 = por %p325, %p326
      %p328 = scmp.ne.s32.totalorder %s317, %s318
      %p329 = scmp.eq.s32.totalorder %s31, 0
      %p330 = por %p328, %p329
      %p331 = scmp.ne.s32.totalorder %s317, %s318
      %p332 = scmp.eq.s32.totalorder %s32, 1
      %p333 = por %p331, %p332
      %p335 = scmp.ne.s32.totalorder %s318, %s334
      %p336 = scmp.eq.s32.totalorder %s32, 0
      %p337 = por %p335, %p336
      %p338 = scmp.le.s32.totalorder 1, %s26
      %p339 = scmp.lt.s32.totalorder %s26, 3
      %p340 = pnand %p338, %p339
      %p341 = pneg %p340
      // Predicated region
      $region9: #{tpu_custom_call.1} parent=5 // pred_check
        _
      $region10: #{tpu_custom_call.1} parent=5 // pred_check_branch
        %343 = sbr.rel (%p340) target = $region12
      $region11: #{tpu_custom_call.1} parent=5 // pred_region
        %s344 = ssub.s32 %s26, 1
        // Predicated region
        $region13: #{tpu_custom_call.1} parent=11 // pred_check
          %p345 = pneg %p85
        $region14: #{tpu_custom_call.1} parent=11 // pred_check_branch
          %347 = sbr.rel (%p345) target = $region16
        $region15: #{tpu_custom_call.1} parent=11 // pred_region
          _
        $region16: #{tpu_custom_call.1} parent=11 // pred_fallthru
          _
        // Predicated region
        $region17: #{tpu_custom_call.1} parent=11 // pred_check
          %p348 = pneg %p111
        $region18: #{tpu_custom_call.1} parent=11 // pred_check_branch
          %350 = sbr.rel (%p348) target = $region20
        $region19: #{tpu_custom_call.1} parent=11 // pred_region
          %s351 = smul.u32 16, %s36
          %p352 = scmp.lt.s32.totalorder %s351, 15
          %s353 = scalar_select %p352, %s351, 15
          %s354 = smul.addr %s353, 2
          %s355 = smul.addr %s354, 4
          %s356 = scalar_lea.vmem %s2, %s355
          %s357 = smul.u32 16, %s36
        $region20: #{tpu_custom_call.1} parent=11 // pred_fallthru
          _
        // Predicated region
        $region21: #{tpu_custom_call.1} parent=11 // pred_check
          %p358 = pneg %p137
        $region22: #{tpu_custom_call.1} parent=11 // pred_check_branch
          %360 = sbr.rel (%p358) target = $region24
        $region23: #{tpu_custom_call.1} parent=11 // pred_region
          %s361 = smul.u32 16, %s36
          %p362 = scmp.lt.s32.totalorder %s361, 15
          %s363 = scalar_select %p362, %s361, 15
          %s364 = smul.addr %s363, 4
          %s365 = scalar_lea.vmem %s3, %s364
          %s366 = smul.u32 16, %s36
        $region24: #{tpu_custom_call.1} parent=11 // pred_fallthru
          _
        // Predicated region
        $region25: #{tpu_custom_call.1} parent=11 // pred_check
          %p367 = pneg %p158
        $region26: #{tpu_custom_call.1} parent=11 // pred_check_branch
          %369 = sbr.rel (%p367) target = $region28
        $region27: #{tpu_custom_call.1} parent=11 // pred_region
          _
        $region28: #{tpu_custom_call.1} parent=11 // pred_fallthru
          _
        // Predicated region
        $region29: #{tpu_custom_call.1} parent=11 // pred_check
          %p370 = pneg %p231
        $region30: #{tpu_custom_call.1} parent=11 // pred_check_branch
          %372 = sbr.rel (%p370) target = $region32
        $region31: #{tpu_custom_call.1} parent=11 // pred_region
          %374 = vsyncadd [#allocation6], 0
          %s375 = sshll.u32 %s7, 4
          %s376 = int_to_ptr.hbm [resolvable:$true] %s375
          %s377 = sshll.u32 [#allocation5], 4
          %s378 = int_to_ptr.vmem [resolvable:$true] %s377
          %383 = dma.hbm_to_vmem [thread:$0]  %s376, 6144, %s378, [#allocation6], 256, 256, 16
        $region32: #{tpu_custom_call.1} parent=11 // pred_fallthru
          _
        // Predicated region
        $region33: #{tpu_custom_call.1} parent=11 // pred_check
          %p384 = pneg %p252
        $region34: #{tpu_custom_call.1} parent=11 // pred_check_branch
          %386 = sbr.rel (%p384) target = $region36
        $region35: #{tpu_custom_call.1} parent=11 // pred_region
          %388 = vsyncadd [#allocation9], 0
          %s389 = sshll.u32 %s8, 4
          %s390 = int_to_ptr.hbm [resolvable:$true] %s389
          %s391 = sshll.u32 [#allocation8], 4
          %s392 = int_to_ptr.vmem [resolvable:$true] %s391
          %397 = dma.hbm_to_vmem [thread:$0]  %s390, 6144, %s392, [#allocation9], 256, 256, 16
        $region36: #{tpu_custom_call.1} parent=11 // pred_fallthru
          _
      $region12: #{tpu_custom_call.1} parent=5 // pred_fallthru
        _
      %p398 = scmp.lt.s32.totalorder %s26, 2
      // Predicated region
      $region37: #{tpu_custom_call.1} parent=5 // pred_check
        %p399 = pneg %p398
      $region38: #{tpu_custom_call.1} parent=5 // pred_check_branch
        %401 = sbr.rel (%p399) target = $region40
      $region39: #{tpu_custom_call.1} parent=5 // pred_region
        // Predicated region
        $region41: #{tpu_custom_call.1} parent=39 // pred_check
          %p402 = pneg %p58
        $region42: #{tpu_custom_call.1} parent=39 // pred_check_branch
          %404 = sbr.rel (%p402) target = $region44
        $region43: #{tpu_custom_call.1} parent=39 // pred_region
          %p405 = scmp.lt.s32.totalorder %s33, 1
          %s406 = scalar_select %p405, %s33, 1
          %s407 = smul.addr %s406, 8
          %s408 = scalar_lea.vmem %s0, %s407
        $region44: #{tpu_custom_call.1} parent=39 // pred_fallthru
          _
        // Predicated region
        $region45: #{tpu_custom_call.1} parent=39 // pred_check
          %p409 = pneg %p178
        $region46: #{tpu_custom_call.1} parent=39 // pred_check_branch
          %411 = sbr.rel (%p409) target = $region48
        $region47: #{tpu_custom_call.1} parent=39 // pred_region
          %p412 = scmp.lt.s32.totalorder %s33, 1
          %s413 = scalar_select %p412, %s33, 1
          %s414 = smul.addr %s413, 2
          %s415 = smul.addr %s414, 8
          %s416 = scalar_lea.vmem %s5, %s415
        $region48: #{tpu_custom_call.1} parent=39 // pred_fallthru
          _
        // Predicated region
        $region49: #{tpu_custom_call.1} parent=39 // pred_check
          %p417 = pneg %p204
        $region50: #{tpu_custom_call.1} parent=39 // pred_check_branch
          %419 = sbr.rel (%p417) target = $region52
        $region51: #{tpu_custom_call.1} parent=39 // pred_region
          %p420 = scmp.lt.s32.totalorder %s33, 1
          %s421 = scalar_select %p420, %s33, 1
          %s422 = smul.addr %s421, 2
          %s423 = smul.addr %s422, 8
          %s424 = scalar_lea.vmem %s6, %s423
        $region52: #{tpu_custom_call.1} parent=39 // pred_fallthru
          _
      $region40: #{tpu_custom_call.1} parent=5 // pred_fallthru
        _
      %p425 = scmp.le.s32.totalorder 1, %s26
      %p426 = scmp.lt.s32.totalorder %s26, 3
      %p427 = pnand %p425, %p426
      %p428 = pneg %p427
      // Predicated region
      $region53: #{tpu_custom_call.1} parent=5 // pred_check
        _
      $region54: #{tpu_custom_call.1} parent=5 // pred_check_branch
        %430 = sbr.rel (%p427) target = $region56
      $region55: #{tpu_custom_call.1} parent=5 // pred_region
        %s431 = ssub.s32 %s26, 1
        // Predicated region
        $region57: #{tpu_custom_call.1} parent=55 // pred_check
          %p432 = pneg %p231
        $region58: #{tpu_custom_call.1} parent=55 // pred_check_branch
          %434 = sbr.rel (%p432) target = $region60
        $region59: #{tpu_custom_call.1} parent=55 // pred_region
          %436 = dma.done [#allocation6], 6144
        $region60: #{tpu_custom_call.1} parent=55 // pred_fallthru
          _
        // Predicated region
        $region61: #{tpu_custom_call.1} parent=55 // pred_check
          %p437 = pneg %p252
        $region62: #{tpu_custom_call.1} parent=55 // pred_check_branch
          %439 = sbr.rel (%p437) target = $region64
        $region63: #{tpu_custom_call.1} parent=55 // pred_region
          %441 = dma.done [#allocation9], 6144
        $region64: #{tpu_custom_call.1} parent=55 // pred_fallthru
          _
        %p442 = scmp.lt.s32.totalorder %s35, 1
        %s443 = scalar_select %p442, %s35, 1
        %s444 = smul.addr %s443, 8
        %s445 = scalar_lea.vmem %s0, %s444
        %p446 = pneg %p64
        %p447 = pneg %p61
        %p448 = pneg %p85
        %p449 = pneg %p82
        %s450 = smul.u32 16, %s36
        %p451 = scmp.lt.s32.totalorder %s450, 15
        %s452 = scalar_select %p451, %s450, 15
        %s453 = smul.addr %s452, 2
        %s454 = smul.addr %s453, 4
        %s455 = scalar_lea.vmem %s2, %s454
        %p456 = pneg %p111
        %p457 = pneg %p108
        %s458 = smul.u32 16, %s36
        %p459 = scmp.lt.s32.totalorder %s458, 15
        %s460 = scalar_select %p459, %s458, 15
        %s461 = smul.addr %s460, 4
        %s462 = scalar_lea.vmem %s3, %s461
        %p463 = pneg %p137
        %p464 = pneg %p134
        %p465 = pneg %p158
        %p466 = pneg %p155
        %p467 = scmp.lt.s32.totalorder %s35, 1
        %s468 = scalar_select %p467, %s35, 1
        %s469 = smul.addr %s468, 2
        %s470 = smul.addr %s469, 8
        %s471 = scalar_lea.vmem %s5, %s470
        %p472 = pneg %p184
        %p473 = pneg %p181
        %p474 = scmp.lt.s32.totalorder %s35, 1
        %s475 = scalar_select %p474, %s35, 1
        %s476 = smul.addr %s475, 2
        %s477 = smul.addr %s476, 8
        %s478 = scalar_lea.vmem %s6, %s477
        %p479 = pneg %p210
        %p480 = pneg %p207
        %p481 = pneg %p231
        %p482 = pneg %p228
        %p483 = pneg %p252
        %p484 = pneg %p249
        %p485 = pneg %p278
        %p486 = pneg %p275
        %s487 = sand.u32 %s265, 1
        %s488 = scalar_lea.sflag [#allocation7], %s487
        %s489 = sand.u32 %s265, 1
        %s490 = smul.addr %s489, 4
        %s491 = scalar_lea.vmem [#allocation10], %s490
        %p492 = pneg %p304
        %p493 = pneg %p301
        %s494 = sand.u32 %s31, 1
        %s495 = scalar_lea.sflag [#allocation12], %s494
        %s496 = sand.u32 %s291, 1
        %s497 = smul.addr %s496, 4
        %s498 = scalar_lea.vmem [#allocation11], %s497
        %p499 = pneg %p330
        %p500 = pneg %p327
        %s501 = sand.u32 %s31, 1
        %s502 = scalar_lea.sflag [#allocation12], %s501
        %s503 = sand.u32 %s317, 1
        %s504 = smul.addr %s503, 4
        %s505 = scalar_lea.vmem [#allocation13], %s504
        %p506 = scmp.lt.s32.totalorder %s35, 1
        %s507 = scalar_select %p506, %s35, 1
        %s508 = smul.addr %s507, 8
        %s509 = scalar_lea.vmem %s0, %s508
        %s510 = smul.u32 16, %s36
        %p511 = scmp.lt.s32.totalorder %s510, 15
        %s512 = scalar_select %p511, %s510, 15
        %s513 = smul.addr %s512, 2
        %s514 = smul.addr %s513, 4
        %s515 = scalar_lea.vmem %s2, %s514
        %s516 = smul.u32 16, %s36
        %s517 = smul.u32 16, %s36
        %p518 = scmp.lt.s32.totalorder %s517, 15
        %s519 = scalar_select %p518, %s517, 15
        %s520 = smul.addr %s519, 4
        %s521 = scalar_lea.vmem %s3, %s520
        %s522 = smul.u32 16, %s36
        %p523 = scmp.lt.s32.totalorder %s35, 1
        %s524 = scalar_select %p523, %s35, 1
        %s525 = smul.addr %s524, 2
        %s526 = smul.addr %s525, 8
        %s527 = scalar_lea.vmem %s5, %s526
        %p528 = scmp.lt.s32.totalorder %s35, 1
        %s529 = scalar_select %p528, %s35, 1
        %s530 = smul.addr %s529, 2
        %s531 = smul.addr %s530, 8
        %s532 = scalar_lea.vmem %s6, %s531
        %p533 = scmp.eq.s32.totalorder %s36, 0
        // Predicated region
        $region65: #{tpu_custom_call.1} parent=55 // pred_check
          %p534 = pneg %p533
        $region66: #{tpu_custom_call.1} parent=55 // pred_check_branch
          %536 = sbr.rel (%p534) target = $region68
        $region67: #{tpu_custom_call.1} parent=55 // pred_region
          %v537 = vld [vmem:[%s509] sm:$0xff]
          %v538 = vmul.f32 %v537, %v537
          %539 = vadd.xlane.f32.xlu0 %v538
          %v540 = vpop.xlane.xlu0 %539
          %v541 = vrcp.pop 128.0
          %v542 = vmul.f32 128.0, %v541
          %v543 = vsub.f32 1.0, %v542
          %v544 = vmul.f32 %v541, %v543
          %v545 = vadd.f32 %v541, %v544
          %vm546 = vweird.f32 %v541
          %v547 = vsel %vm546, %v541, %v545
          %v548 = vmul.f32 %v540, %v547
          %v549 = vadd.f32 %v548, 1e-06
          %v550 = vrsqrt.pop %v549
          %v551 = vmul.f32 %v550, %v549
          %v552 = vmul.f32 %v551, %v550
          %v553 = vmul.f32 0.5, %v552
          %v554 = vsub.f32 1.5, %v553
          %v555 = vmul.f32 %v550, %v554
          %vm556 = vweird.f32 %v549
          %vm557 = vweird.f32 %v550
          %vm558 = vmor %vm556, %vm557
          %v559 = vsel %vm558, %v550, %v555
          %v560 = vmul.f32 %v537, %v559
          %v561 = vld [vmem:[%s1] sm:$0x1]
          %v563 = vperm.slane %v561, 0
          %v565 = vmul.f32 %v560, %v563
          %v566 = vpack.c.bf16 %v565, %v565
          %567 = vst [vmem:[#allocation2] sm:$0xf] %v566
          %568 = vst [vmem:[#allocation3] sm:$0xff] 0.0
          %vm569 = vcmask 523264
          %570 = vst.msk [vmem:[#allocation3 + $0x8] sm:$0xff] %vm569, 0.0
          %571 = vst.msk [vmem:[#allocation4] sm:$0xff] %vm569, 0.0
        $region68: #{tpu_custom_call.1} parent=55 // pred_fallthru
          _
        %v572 = vld [vmem:[#allocation2] sm:$0xf]
        %v573 = vld [vmem:[#allocation3] sm:$0xff]
        %v574 = vld [vmem:[#allocation3 + $0x8] sm:$0xff]
        %v575 = vld [vmem:[%s515] sm:$0xff]
        %v576 = vld [vmem:[%s515 + $0x8] sm:$0xff]
        %v577 = vld [vmem:[%s515 + $0x10] sm:$0xff]
        %v578 = vld [vmem:[%s515 + $0x18] sm:$0xff]
        %v579 = vld [vmem:[%s515 + $0x20] sm:$0xff]
        %v580 = vld [vmem:[%s515 + $0x28] sm:$0xff]
        %v581 = vld [vmem:[%s515 + $0x30] sm:$0xff]
        %v582 = vld [vmem:[%s515 + $0x38] sm:$0xff]
        %v583 = vld [vmem:[%s515 + $0x40] sm:$0xff]
        %v584 = vld [vmem:[%s515 + $0x48] sm:$0xff]
        %v585 = vld [vmem:[%s515 + $0x50] sm:$0xff]
        %v586 = vld [vmem:[%s515 + $0x58] sm:$0xff]
        %v587 = vld [vmem:[%s515 + $0x60] sm:$0xff]
        %v588 = vld [vmem:[%s515 + $0x68] sm:$0xff]
        %v589 = vld [vmem:[%s515 + $0x70] sm:$0xff]
        %v590 = vld [vmem:[%s515 + $0x78] sm:$0xff]
        %v607 = vunpack.c.l.b16 %v575
        %v608 = vunpack.c.h.b16 %v575
        %v609 = vunpack.c.l.b16 %v576
        %v610 = vunpack.c.h.b16 %v576
        %v611 = vunpack.c.l.b16 %v577
        %v612 = vunpack.c.h.b16 %v577
        %v613 = vunpack.c.l.b16 %v578
        %v614 = vunpack.c.h.b16 %v578
        %v615 = vunpack.c.l.b16 %v579
        %v616 = vunpack.c.h.b16 %v579
        %v617 = vunpack.c.l.b16 %v580
        %v618 = vunpack.c.h.b16 %v580
        %v619 = vunpack.c.l.b16 %v581
        %v620 = vunpack.c.h.b16 %v581
        %v621 = vunpack.c.l.b16 %v582
        %v622 = vunpack.c.h.b16 %v582
        %v623 = vunpack.c.l.b16 %v583
        %v624 = vunpack.c.h.b16 %v583
        %v625 = vunpack.c.l.b16 %v584
        %v626 = vunpack.c.h.b16 %v584
        %v627 = vunpack.c.l.b16 %v585
        %v628 = vunpack.c.h.b16 %v585
        %v629 = vunpack.c.l.b16 %v586
        %v630 = vunpack.c.h.b16 %v586
        %v631 = vunpack.c.l.b16 %v587
        %v632 = vunpack.c.h.b16 %v587
        %v633 = vunpack.c.l.b16 %v588
        %v634 = vunpack.c.h.b16 %v588
        %v635 = vunpack.c.l.b16 %v589
        %v636 = vunpack.c.h.b16 %v589
        %v637 = vunpack.c.l.b16 %v590
        %v638 = vunpack.c.h.b16 %v590
        %v639 = vpack.c.b16 %v609, %v607
        %v640 = vpack.c.b16 %v610, %v608
        %v641 = vpack.c.b16 %v613, %v611
        %v642 = vpack.c.b16 %v614, %v612
        %v643 = vpack.c.b16 %v617, %v615
        %v644 = vpack.c.b16 %v618, %v616
        %v645 = vpack.c.b16 %v621, %v619
        %v646 = vpack.c.b16 %v622, %v620
        %v647 = vpack.c.b16 %v625, %v623
        %v648 = vpack.c.b16 %v626, %v624
        %v649 = vpack.c.b16 %v629, %v627
        %v650 = vpack.c.b16 %v630, %v628
        %v651 = vpack.c.b16 %v633, %v631
        %v652 = vpack.c.b16 %v634, %v632
        %v653 = vpack.c.b16 %v637, %v635
        %v654 = vpack.c.b16 %v638, %v636
        %671 = vmatpush.bf16.msra.mxu0 %v653
        %672 = vmatpush.bf16.msra.mxu0 %v651
        %673 = vmatpush.bf16.msra.mxu0 %v649
        %674 = vmatpush.bf16.msra.mxu0 %v647
        %675 = vmatpush.bf16.msra.mxu0 %v645
        %676 = vmatpush.bf16.msra.mxu0 %v643
        %677 = vmatpush.bf16.msra.mxu0 %v641
        %678 = vmatpush.bf16.msra.mxu0 %v639
        %679 = vmatmul.bf16.gmra.mxu0 %v572
        %v680 = vpop.f32.mrf.mxu0
        %v681 = vadd.f32 0.0, %v680
        %v682 = vpop.f32.mrf.mxu0
        %683 = vdwg.mxu0
        %684 = vmatpush.bf16.msra.mxu0 %v654
        %685 = vmatpush.bf16.msra.mxu0 %v652
        %686 = vmatpush.bf16.msra.mxu0 %v650
        %687 = vmatpush.bf16.msra.mxu0 %v648
        %688 = vmatpush.bf16.msra.mxu0 %v646
        %689 = vmatpush.bf16.msra.mxu0 %v644
        %690 = vmatpush.bf16.msra.mxu0 %v642
        %691 = vmatpush.bf16.msra.mxu0 %v640
        %692 = vmatmul.bf16.gmra.mxu0 %v572
        %v693 = vpop.f32.mrf.mxu0
        %v694 = vadd.f32 0.0, %v693
        %v695 = vpop.f32.mrf.mxu0
        %696 = vdwg.mxu0
        %v697 = vadd.f32 %v573, %v681
        %v698 = vadd.f32 %v574, %v694
        %699 = vst [vmem:[#allocation3] sm:$0xff] %v697
        %vm700 = vcmask 523264
        %701 = vst.msk [vmem:[#allocation3 + $0x8] sm:$0xff] %vm700, %v698
        %v702 = vld [vmem:[#allocation4] sm:$0xff]
        %v703 = vld [vmem:[%s521] sm:$0xf]
        %v704 = vld [vmem:[%s521 + $0x4] sm:$0xf]
        %v705 = vld [vmem:[%s521 + $0x8] sm:$0xf]
        %v706 = vld [vmem:[%s521 + $0xc] sm:$0xf]
        %v707 = vld [vmem:[%s521 + $0x10] sm:$0xf]
        %v708 = vld [vmem:[%s521 + $0x14] sm:$0xf]
        %v709 = vld [vmem:[%s521 + $0x18] sm:$0xf]
        %v710 = vld [vmem:[%s521 + $0x1c] sm:$0xf]
        %v711 = vld [vmem:[%s521 + $0x20] sm:$0xf]
        %v712 = vld [vmem:[%s521 + $0x24] sm:$0xf]
        %v713 = vld [vmem:[%s521 + $0x28] sm:$0xf]
        %v714 = vld [vmem:[%s521 + $0x2c] sm:$0xf]
        %v715 = vld [vmem:[%s521 + $0x30] sm:$0xf]
        %v716 = vld [vmem:[%s521 + $0x34] sm:$0xf]
        %v717 = vld [vmem:[%s521 + $0x38] sm:$0xf]
        %v718 = vld [vmem:[%s521 + $0x3c] sm:$0xf]
        %v735 = vunpack.c.l.b16 %v703
        %v736 = vunpack.c.l.b16 %v704
        %v737 = vunpack.c.l.b16 %v705
        %v738 = vunpack.c.l.b16 %v706
        %v739 = vunpack.c.l.b16 %v707
        %v740 = vunpack.c.l.b16 %v708
        %v741 = vunpack.c.l.b16 %v709
        %v742 = vunpack.c.l.b16 %v710
        %v743 = vunpack.c.l.b16 %v711
        %v744 = vunpack.c.l.b16 %v712
        %v745 = vunpack.c.l.b16 %v713
        %v746 = vunpack.c.l.b16 %v714
        %v747 = vunpack.c.l.b16 %v715
        %v748 = vunpack.c.l.b16 %v716
        %v749 = vunpack.c.l.b16 %v717
        %v750 = vunpack.c.l.b16 %v718
        %v751 = vpack.c.b16 %v736, %v735
        %v752 = vpack.c.b16 %v738, %v737
        %v753 = vpack.c.b16 %v740, %v739
        %v754 = vpack.c.b16 %v742, %v741
        %v755 = vpack.c.b16 %v744, %v743
        %v756 = vpack.c.b16 %v746, %v745
        %v757 = vpack.c.b16 %v748, %v747
        %v758 = vpack.c.b16 %v750, %v749
        %767 = vmatpush.bf16.msra.mxu0 %v758
        %768 = vmatpush.bf16.msra.mxu0 %v757
        %769 = vmatpush.bf16.msra.mxu0 %v756
        %770 = vmatpush.bf16.msra.mxu0 %v755
        %771 = vmatpush.bf16.msra.mxu0 %v754
        %772 = vmatpush.bf16.msra.mxu0 %v753
        %773 = vmatpush.bf16.msra.mxu0 %v752
        %774 = vmatpush.bf16.msra.mxu0 %v751
        %775 = vmatmul.bf16.gmra.mxu0 %v572
        %v776 = vpop.f32.mrf.mxu0
        %v777 = vadd.f32 0.0, %v776
        %v778 = vpop.f32.mrf.mxu0
        %779 = vdwg.mxu0
        %v780 = vadd.f32 %v702, %v777
        %781 = vst.msk [vmem:[#allocation4] sm:$0xff] %vm700, %v780
        // Predicated region
        $region69: #{tpu_custom_call.1} parent=55 // pred_check
          %p782 = pneg %p533
        $region70: #{tpu_custom_call.1} parent=55 // pred_check_branch
          %784 = sbr.rel (%p782) target = $region72
        $region71: #{tpu_custom_call.1} parent=55 // pred_region
          %v785 = vld [vmem:[#allocation3] sm:$0xff]
          %v786 = vld [vmem:[#allocation3 + $0x8] sm:$0xff]
          %v787 = vmul.f32 %v785, %v785
          %v788 = vmul.f32 %v786, %v786
          %v789 = vld [vmem:[#allocation5] sm:$0xff]
          %v790 = vld [vmem:[#allocation5 + $0x8] sm:$0xff]
          %v791 = vld [vmem:[#allocation5 + $0x10] sm:$0xff]
          %v792 = vld [vmem:[#allocation5 + $0x18] sm:$0xff]
          %v793 = vld [vmem:[#allocation5 + $0x20] sm:$0xff]
          %v794 = vld [vmem:[#allocation5 + $0x28] sm:$0xff]
          %v795 = vld [vmem:[#allocation5 + $0x30] sm:$0xff]
          %v796 = vld [vmem:[#allocation5 + $0x38] sm:$0xff]
          %v797 = vld [vmem:[#allocation5 + $0x40] sm:$0xff]
          %v798 = vld [vmem:[#allocation5 + $0x48] sm:$0xff]
          %v799 = vld [vmem:[#allocation5 + $0x50] sm:$0xff]
          %v800 = vld [vmem:[#allocation5 + $0x58] sm:$0xff]
          %v801 = vld [vmem:[#allocation5 + $0x60] sm:$0xff]
          %v802 = vld [vmem:[#allocation5 + $0x68] sm:$0xff]
          %v803 = vld [vmem:[#allocation5 + $0x70] sm:$0xff]
          %v804 = vld [vmem:[#allocation5 + $0x78] sm:$0xff]
          %v805 = vld [vmem:[#allocation5 + $0x80] sm:$0xff]
          %v806 = vld [vmem:[#allocation5 + $0x88] sm:$0xff]
          %v807 = vld [vmem:[#allocation5 + $0x90] sm:$0xff]
          %v808 = vld [vmem:[#allocation5 + $0x98] sm:$0xff]
          %v809 = vld [vmem:[#allocation5 + $0xa0] sm:$0xff]
          %v810 = vld [vmem:[#allocation5 + $0xa8] sm:$0xff]
          %v811 = vld [vmem:[#allocation5 + $0xb0] sm:$0xff]
          %v812 = vld [vmem:[#allocation5 + $0xb8] sm:$0xff]
          %v813 = vld [vmem:[#allocation5 + $0xc0] sm:$0xff]
          %v814 = vld [vmem:[#allocation5 + $0xc8] sm:$0xff]
          %v815 = vld [vmem:[#allocation5 + $0xd0] sm:$0xff]
          %v816 = vld [vmem:[#allocation5 + $0xd8] sm:$0xff]
          %v817 = vld [vmem:[#allocation5 + $0xe0] sm:$0xff]
          %v818 = vld [vmem:[#allocation5 + $0xe8] sm:$0xff]
          %v819 = vld [vmem:[#allocation5 + $0xf0] sm:$0xff]
          %v820 = vld [vmem:[#allocation5 + $0xf8] sm:$0xff]
          %v821 = vld [vmem:[#allocation5 + $0x100] sm:$0xff]
          %v822 = vld [vmem:[#allocation5 + $0x108] sm:$0xff]
          %v823 = vld [vmem:[#allocation5 + $0x110] sm:$0xff]
          %v824 = vld [vmem:[#allocation5 + $0x118] sm:$0xff]
          %v825 = vld [vmem:[#allocation5 + $0x120] sm:$0xff]
          %v826 = vld [vmem:[#allocation5 + $0x128] sm:$0xff]
          %v827 = vld [vmem:[#allocation5 + $0x130] sm:$0xff]
          %v828 = vld [vmem:[#allocation5 + $0x138] sm:$0xff]
          %v829 = vld [vmem:[#allocation5 + $0x140] sm:$0xff]
          %v830 = vld [vmem:[#allocation5 + $0x148] sm:$0xff]
          %v831 = vld [vmem:[#allocation5 + $0x150] sm:$0xff]
          %v832 = vld [vmem:[#allocation5 + $0x158] sm:$0xff]
          %v833 = vld [vmem:[#allocation5 + $0x160] sm:$0xff]
          %v834 = vld [vmem:[#allocation5 + $0x168] sm:$0xff]
          %v835 = vld [vmem:[#allocation5 + $0x170] sm:$0xff]
          %v836 = vld [vmem:[#allocation5 + $0x178] sm:$0xff]
          %v838 = vsel %vm700, %v788, 0
          %840 = vmatpush.msra.mxu0 %v819
          %841 = vmatpush.msra.mxu0 %v817
          %842 = vmatpush.msra.mxu0 %v815
          %843 = vmatpush.msra.mxu0 %v813
          %844 = vmatpush.msra.mxu0 %v811
          %845 = vmatpush.msra.mxu0 %v809
          %846 = vmatpush.msra.mxu0 %v807
          %847 = vmatpush.msra.mxu0 %v805
          %848 = vmatpush.msra.mxu0 %v803
          %849 = vmatpush.msra.mxu0 %v801
          %850 = vmatpush.msra.mxu0 %v799
          %851 = vmatpush.msra.mxu0 %v797
          %852 = vmatpush.msra.mxu0 %v795
          %853 = vmatpush.msra.mxu0 %v793
          %854 = vmatpush.msra.mxu0 %v791
          %855 = vmatpush.msra.mxu0 %v789
          %856 = vmatmul.f32.gmra.mxu0 %v787
          %v857 = vpop.f32.mrf.mxu0
          %v858 = vadd.f32 1e-06, %v857
          %859 = vdwg.mxu0
          %860 = vmatpush.msra.mxu0 0.0
          %861 = vmatpush.msra.mxu0 0.0
          %862 = vmatpush.msra.mxu0 0.0
          %863 = vmatpush.msra.mxu0 0.0
          %864 = vmatpush.msra.mxu0 0.0
          %865 = vmatpush.msra.mxu0 0.0
          %866 = vmatpush.msra.mxu0 0.0
          %867 = vmatpush.msra.mxu0 0.0
          %868 = vmatpush.msra.mxu0 %v835
          %869 = vmatpush.msra.mxu0 %v833
          %870 = vmatpush.msra.mxu0 %v831
          %871 = vmatpush.msra.mxu0 %v829
          %872 = vmatpush.msra.mxu0 %v827
          %873 = vmatpush.msra.mxu0 %v825
          %874 = vmatpush.msra.mxu0 %v823
          %875 = vmatpush.msra.mxu0 %v821
          %876 = vmatmul.f32.gmra.mxu0 %v838
          %v877 = vpop.f32.mrf.mxu0
          %v878 = vadd.f32 %v858, %v877
          %879 = vdwg.mxu0
          %880 = vmatpush.msra.mxu0 %v820
          %881 = vmatpush.msra.mxu0 %v818
          %882 = vmatpush.msra.mxu0 %v816
          %883 = vmatpush.msra.mxu0 %v814
          %884 = vmatpush.msra.mxu0 %v812
          %885 = vmatpush.msra.mxu0 %v810
          %886 = vmatpush.msra.mxu0 %v808
          %887 = vmatpush.msra.mxu0 %v806
          %888 = vmatpush.msra.mxu0 %v804
          %889 = vmatpush.msra.mxu0 %v802
          %890 = vmatpush.msra.mxu0 %v800
          %891 = vmatpush.msra.mxu0 %v798
          %892 = vmatpush.msra.mxu0 %v796
          %893 = vmatpush.msra.mxu0 %v794
          %894 = vmatpush.msra.mxu0 %v792
          %895 = vmatpush.msra.mxu0 %v790
          %896 = vmatmul.f32.gmra.mxu0 %v787
          %v897 = vpop.f32.mrf.mxu0
          %v898 = vadd.f32 1e-06, %v897
          %899 = vdwg.mxu0
          %900 = vmatpush.msra.mxu0 0.0
          %901 = vmatpush.msra.mxu0 0.0
          %902 = vmatpush.msra.mxu0 0.0
          %903 = vmatpush.msra.mxu0 0.0
          %904 = vmatpush.msra.mxu0 0.0
          %905 = vmatpush.msra.mxu0 0.0
          %906 = vmatpush.msra.mxu0 0.0
          %907 = vmatpush.msra.mxu0 0.0
          %908 = vmatpush.msra.mxu0 %v836
          %909 = vmatpush.msra.mxu0 %v834
          %910 = vmatpush.msra.mxu0 %v832
          %911 = vmatpush.msra.mxu0 %v830
          %912 = vmatpush.msra.mxu0 %v828
          %913 = vmatpush.msra.mxu0 %v826
          %914 = vmatpush.msra.mxu0 %v824
          %915 = vmatpush.msra.mxu0 %v822
          %916 = vmatmul.f32.gmra.mxu0 %v838
          %v917 = vpop.f32.mrf.mxu0
          %v918 = vadd.f32 %v898, %v917
          %919 = vdwg.mxu0
          %v920 = vrsqrt.pop %v878
          %v921 = vmul.f32 %v920, %v878
          %v922 = vmul.f32 %v921, %v920
          %v923 = vmul.f32 0.5, %v922
          %v924 = vsub.f32 1.5, %v923
          %v925 = vmul.f32 %v920, %v924
          %vm926 = vweird.f32 %v878
          %vm927 = vweird.f32 %v920
          %vm928 = vmor %vm926, %vm927
          %v929 = vsel %vm928, %v920, %v925
          %v930 = vrsqrt.pop %v918
          %v931 = vmul.f32 %v930, %v918
          %v932 = vmul.f32 %v931, %v930
          %v933 = vmul.f32 0.5, %v932
          %v934 = vsub.f32 1.5, %v933
          %v935 = vmul.f32 %v930, %v934
          %vm936 = vweird.f32 %v918
          %vm937 = vweird.f32 %v930
          %vm938 = vmor %vm936, %vm937
          %v939 = vsel %vm938, %v930, %v935
          %v940 = vmul.f32 %v785, %v929
          %v941 = vmul.f32 %v786, %v939
          %v942 = vld [vmem:[%s4] sm:$0x3]
          %v944 = vperm.slane %v942, 0
          %v945 = vperm.slane %v942, 1
          %v948 = vmul.f32 %v940, %v944
          %v949 = vmul.f32 %v941, %v945
          %v950 = vld [vmem:[#allocation8] sm:$0xff]
          %v951 = vld [vmem:[#allocation8 + $0x8] sm:$0xff]
          %v952 = vld [vmem:[#allocation8 + $0x10] sm:$0xff]
          %v953 = vld [vmem:[#allocation8 + $0x18] sm:$0xff]
          %v954 = vld [vmem:[#allocation8 + $0x20] sm:$0xff]
          %v955 = vld [vmem:[#allocation8 + $0x28] sm:$0xff]
          %v956 = vld [vmem:[#allocation8 + $0x30] sm:$0xff]
          %v957 = vld [vmem:[#allocation8 + $0x38] sm:$0xff]
          %v958 = vld [vmem:[#allocation8 + $0x40] sm:$0xff]
          %v959 = vld [vmem:[#allocation8 + $0x48] sm:$0xff]
          %v960 = vld [vmem:[#allocation8 + $0x50] sm:$0xff]
          %v961 = vld [vmem:[#allocation8 + $0x58] sm:$0xff]
          %v962 = vld [vmem:[#allocation8 + $0x60] sm:$0xff]
          %v963 = vld [vmem:[#allocation8 + $0x68] sm:$0xff]
          %v964 = vld [vmem:[#allocation8 + $0x70] sm:$0xff]
          %v965 = vld [vmem:[#allocation8 + $0x78] sm:$0xff]
          %v966 = vld [vmem:[#allocation8 + $0x80] sm:$0xff]
          %v967 = vld [vmem:[#allocation8 + $0x88] sm:$0xff]
          %v968 = vld [vmem:[#allocation8 + $0x90] sm:$0xff]
          %v969 = vld [vmem:[#allocation8 + $0x98] sm:$0xff]
          %v970 = vld [vmem:[#allocation8 + $0xa0] sm:$0xff]
          %v971 = vld [vmem:[#allocation8 + $0xa8] sm:$0xff]
          %v972 = vld [vmem:[#allocation8 + $0xb0] sm:$0xff]
          %v973 = vld [vmem:[#allocation8 + $0xb8] sm:$0xff]
          %v974 = vld [vmem:[#allocation8 + $0xc0] sm:$0xff]
          %v975 = vld [vmem:[#allocation8 + $0xc8] sm:$0xff]
          %v976 = vld [vmem:[#allocation8 + $0xd0] sm:$0xff]
          %v977 = vld [vmem:[#allocation8 + $0xd8] sm:$0xff]
          %v978 = vld [vmem:[#allocation8 + $0xe0] sm:$0xff]
          %v979 = vld [vmem:[#allocation8 + $0xe8] sm:$0xff]
          %v980 = vld [vmem:[#allocation8 + $0xf0] sm:$0xff]
          %v981 = vld [vmem:[#allocation8 + $0xf8] sm:$0xff]
          %v982 = vld [vmem:[#allocation8 + $0x100] sm:$0xff]
          %v983 = vld [vmem:[#allocation8 + $0x108] sm:$0xff]
          %v984 = vld [vmem:[#allocation8 + $0x110] sm:$0xff]
          %v985 = vld [vmem:[#allocation8 + $0x118] sm:$0xff]
          %v986 = vld [vmem:[#allocation8 + $0x120] sm:$0xff]
          %v987 = vld [vmem:[#allocation8 + $0x128] sm:$0xff]
          %v988 = vld [vmem:[#allocation8 + $0x130] sm:$0xff]
          %v989 = vld [vmem:[#allocation8 + $0x138] sm:$0xff]
          %v990 = vld [vmem:[#allocation8 + $0x140] sm:$0xff]
          %v991 = vld [vmem:[#allocation8 + $0x148] sm:$0xff]
          %v992 = vld [vmem:[#allocation8 + $0x150] sm:$0xff]
          %v993 = vld [vmem:[#allocation8 + $0x158] sm:$0xff]
          %v994 = vld [vmem:[#allocation8 + $0x160] sm:$0xff]
          %v995 = vld [vmem:[#allocation8 + $0x168] sm:$0xff]
          %v996 = vld [vmem:[#allocation8 + $0x170] sm:$0xff]
          %v997 = vld [vmem:[#allocation8 + $0x178] sm:$0xff]
          %v999 = vsel %vm700, %v949, 0
          %1001 = vmatpush.msra.mxu0 %v980
          %1002 = vmatpush.msra.mxu0 %v978
          %1003 = vmatpush.msra.mxu0 %v976
          %1004 = vmatpush.msra.mxu0 %v974
          %1005 = vmatpush.msra.mxu0 %v972
          %1006 = vmatpush.msra.mxu0 %v970
          %1007 = vmatpush.msra.mxu0 %v968
          %1008 = vmatpush.msra.mxu0 %v966
          %1009 = vmatpush.msra.mxu0 %v964
          %1010 = vmatpush.msra.mxu0 %v962
          %1011 = vmatpush.msra.mxu0 %v960
          %1012 = vmatpush.msra.mxu0 %v958
          %1013 = vmatpush.msra.mxu0 %v956
          %1014 = vmatpush.msra.mxu0 %v954
          %1015 = vmatpush.msra.mxu0 %v952
          %1016 = vmatpush.msra.mxu0 %v950
          %1017 = vmatmul.f32.gmra.mxu0 %v948
          %v1018 = vpop.f32.mrf.mxu0
          %v1019 = vadd.f32 0.0, %v1018
          %1020 = vdwg.mxu0
          %1021 = vmatpush.msra.mxu0 0.0
          %1022 = vmatpush.msra.mxu0 0.0
          %1023 = vmatpush.msra.mxu0 0.0
          %1024 = vmatpush.msra.mxu0 0.0
          %1025 = vmatpush.msra.mxu0 0.0
          %1026 = vmatpush.msra.mxu0 0.0
          %1027 = vmatpush.msra.mxu0 0.0
          %1028 = vmatpush.msra.mxu0 0.0
          %1029 = vmatpush.msra.mxu0 %v996
          %1030 = vmatpush.msra.mxu0 %v994
          %1031 = vmatpush.msra.mxu0 %v992
          %1032 = vmatpush.msra.mxu0 %v990
          %1033 = vmatpush.msra.mxu0 %v988
          %1034 = vmatpush.msra.mxu0 %v986
          %1035 = vmatpush.msra.mxu0 %v984
          %1036 = vmatpush.msra.mxu0 %v982
          %1037 = vmatmul.f32.gmra.mxu0 %v999
          %v1038 = vpop.f32.mrf.mxu0
          %v1039 = vadd.f32 %v1019, %v1038
          %1040 = vdwg.mxu0
          %1041 = vmatpush.msra.mxu0 %v981
          %1042 = vmatpush.msra.mxu0 %v979
          %1043 = vmatpush.msra.mxu0 %v977
          %1044 = vmatpush.msra.mxu0 %v975
          %1045 = vmatpush.msra.mxu0 %v973
          %1046 = vmatpush.msra.mxu0 %v971
          %1047 = vmatpush.msra.mxu0 %v969
          %1048 = vmatpush.msra.mxu0 %v967
          %1049 = vmatpush.msra.mxu0 %v965
          %1050 = vmatpush.msra.mxu0 %v963
          %1051 = vmatpush.msra.mxu0 %v961
          %1052 = vmatpush.msra.mxu0 %v959
          %1053 = vmatpush.msra.mxu0 %v957
          %1054 = vmatpush.msra.mxu0 %v955
          %1055 = vmatpush.msra.mxu0 %v953
          %1056 = vmatpush.msra.mxu0 %v951
          %1057 = vmatmul.f32.gmra.mxu0 %v948
          %v1058 = vpop.f32.mrf.mxu0
          %v1059 = vadd.f32 0.0, %v1058
          %1060 = vdwg.mxu0
          %1061 = vmatpush.msra.mxu0 0.0
          %1062 = vmatpush.msra.mxu0 0.0
          %1063 = vmatpush.msra.mxu0 0.0
          %1064 = vmatpush.msra.mxu0 0.0
          %1065 = vmatpush.msra.mxu0 0.0
          %1066 = vmatpush.msra.mxu0 0.0
          %1067 = vmatpush.msra.mxu0 0.0
          %1068 = vmatpush.msra.mxu0 0.0
          %1069 = vmatpush.msra.mxu0 %v997
          %1070 = vmatpush.msra.mxu0 %v995
          %1071 = vmatpush.msra.mxu0 %v993
          %1072 = vmatpush.msra.mxu0 %v991
          %1073 = vmatpush.msra.mxu0 %v989
          %1074 = vmatpush.msra.mxu0 %v987
          %1075 = vmatpush.msra.mxu0 %v985
          %1076 = vmatpush.msra.mxu0 %v983
          %1077 = vmatmul.f32.gmra.mxu0 %v999
          %v1078 = vpop.f32.mrf.mxu0
          %v1079 = vadd.f32 %v1059, %v1078
          %1080 = vdwg.mxu0
          %v1081 = vld [vmem:[%s527] sm:$0xff]
          %v1082 = vld [vmem:[%s527 + $0x8] sm:$0xff]
          %v1083 = vmul.f32 %v948, %v1081
          %v1084 = vmul.f32 %v949, %v1082
          %v1085 = vld [vmem:[%s532] sm:$0xff]
          %v1086 = vld [vmem:[%s532 + $0x8] sm:$0xff]
          %v1087 = vmul.f32 %v1039, %v1085
          %v1088 = vmul.f32 %v1079, %v1086
          %v1089 = vadd.f32 %v1083, %v1087
          %v1090 = vadd.f32 %v1084, %v1088
          %v1091 = vmul.f32 %v1089, 0.17677669
          %v1092 = vpack.c.bf16 %v1091, %v1091
          %1093 = vst [vmem:[%s491] sm:$0xf] %v1092
          %v1094 = vpack.c.bf16 %v1090, %v1090
          %vm1095 = vcmask 519168
          %1096 = vst.msk [vmem:[%s498] sm:$0xf] %vm1095, %v1094
          %v1097 = vld [vmem:[#allocation4] sm:$0xff]
          %v1098 = vpack.c.bf16 %v1097, %v1097
          %1099 = vst.msk [vmem:[%s505] sm:$0xf] %vm1095, %v1098
        $region72: #{tpu_custom_call.1} parent=55 // pred_fallthru
          _
        %s1100 = sand.u32 %s265, 1
        %s1101 = scalar_lea.sflag [#allocation7], %s1100
        %s1102 = sand.u32 %s265, 1
        %s1103 = smul.addr %s1102, 4
        %s1104 = scalar_lea.vmem [#allocation10], %s1103
        %s1105 = sand.u32 %s31, 1
        %s1106 = scalar_lea.sflag [#allocation12], %s1105
        %s1107 = sand.u32 %s291, 1
        %s1108 = smul.addr %s1107, 4
        %s1109 = scalar_lea.vmem [#allocation11], %s1108
        %s1110 = sand.u32 %s31, 1
        %s1111 = scalar_lea.sflag [#allocation12], %s1110
        %s1112 = sand.u32 %s317, 1
        %s1113 = smul.addr %s1112, 4
        %s1114 = scalar_lea.vmem [#allocation13], %s1113
        // Predicated region
        $region73: #{tpu_custom_call.1} parent=55 // pred_check
          %p1115 = pneg %p275
        $region74: #{tpu_custom_call.1} parent=55 // pred_check_branch
          %1117 = sbr.rel (%p1115) target = $region76
        $region75: #{tpu_custom_call.1} parent=55 // pred_region
          %1119 = vsyncadd %s1101, 0
          %s1120 = smul.addr %s35, 4
          %s1121 = scalar_lea.hbm %s9, %s1120
          %s1123 = sshll.u32 %s1104, 4
          %s1124 = int_to_ptr.vmem [resolvable:$true] %s1123
          %s1125 = sshll.u32 %s1121, 4
          %s1126 = int_to_ptr.hbm [resolvable:$true] %s1125
          %1128 = dma.vmem_to_hbm [thread:$0]  %s1124, 64, %s1126, %s1101
        $region76: #{tpu_custom_call.1} parent=55 // pred_fallthru
          _
        // Predicated region
        $region77: #{tpu_custom_call.1} parent=55 // pred_check
          %p1129 = pneg %p301
        $region78: #{tpu_custom_call.1} parent=55 // pred_check_branch
          %1131 = sbr.rel (%p1129) target = $region80
        $region79: #{tpu_custom_call.1} parent=55 // pred_region
          %1133 = vsyncadd %s1106, 0
          %s1134 = smul.addr %s35, 4
          %s1135 = scalar_lea.hbm %s10, %s1134
          %s1137 = sshll.u32 %s1109, 4
          %s1138 = int_to_ptr.vmem [resolvable:$true] %s1137
          %s1139 = sshll.u32 %s1135, 4
          %s1140 = int_to_ptr.hbm [resolvable:$true] %s1139
          %1142 = dma.vmem_to_hbm [thread:$0]  %s1138, 64, %s1140, %s1106
        $region80: #{tpu_custom_call.1} parent=55 // pred_fallthru
          _
        // Predicated region
        $region81: #{tpu_custom_call.1} parent=55 // pred_check
          %p1143 = pneg %p327
        $region82: #{tpu_custom_call.1} parent=55 // pred_check_branch
          %1145 = sbr.rel (%p1143) target = $region84
        $region83: #{tpu_custom_call.1} parent=55 // pred_region
          %1147 = vsyncadd %s1111, 0
          %s1148 = smul.addr %s35, 4
          %s1149 = scalar_lea.hbm %s11, %s1148
          %s1151 = sshll.u32 %s1114, 4
          %s1152 = int_to_ptr.vmem [resolvable:$true] %s1151
          %s1153 = sshll.u32 %s1149, 4
          %s1154 = int_to_ptr.hbm [resolvable:$true] %s1153
          %1156 = dma.vmem_to_hbm [thread:$0]  %s1152, 64, %s1154, %s1111
        $region84: #{tpu_custom_call.1} parent=55 // pred_fallthru
          _
      $region56: #{tpu_custom_call.1} parent=5 // pred_fallthru
        _
      %p1157 = scmp.le.s32.totalorder 2, %s26
      // Predicated region
      $region85: #{tpu_custom_call.1} parent=5 // pred_check
        %p1158 = pneg %p1157
      $region86: #{tpu_custom_call.1} parent=5 // pred_check_branch
        %1160 = sbr.rel (%p1158) target = $region88
      $region87: #{tpu_custom_call.1} parent=5 // pred_region
        %s1161 = ssub.s32 %s26, 2
        // Predicated region
        $region89: #{tpu_custom_call.1} parent=87 // pred_check
          %p1162 = pneg %p281
        $region90: #{tpu_custom_call.1} parent=87 // pred_check_branch
          %1164 = sbr.rel (%p1162) target = $region92
        $region91: #{tpu_custom_call.1} parent=87 // pred_region
          %s1165 = sand.u32 %s266, 1
          %s1166 = scalar_lea.sflag [#allocation7], %s1165
          %s1167 = sand.u32 %s266, 1
          %s1168 = smul.addr %s1167, 4
          %s1169 = scalar_lea.vmem [#allocation10], %s1168
          %1171 = dma.done %s1166, 64
        $region92: #{tpu_custom_call.1} parent=87 // pred_fallthru
          _
        // Predicated region
        $region93: #{tpu_custom_call.1} parent=87 // pred_check
          %p1172 = pneg %p307
        $region94: #{tpu_custom_call.1} parent=87 // pred_check_branch
          %1174 = sbr.rel (%p1172) target = $region96
        $region95: #{tpu_custom_call.1} parent=87 // pred_region
          %s1175 = sand.u32 %s32, 1
          %s1176 = scalar_lea.sflag [#allocation12], %s1175
          %s1177 = sand.u32 %s292, 1
          %s1178 = smul.addr %s1177, 4
          %s1179 = scalar_lea.vmem [#allocation11], %s1178
          %1181 = dma.done %s1176, 64
        $region96: #{tpu_custom_call.1} parent=87 // pred_fallthru
          _
        // Predicated region
        $region97: #{tpu_custom_call.1} parent=87 // pred_check
          %p1182 = pneg %p333
        $region98: #{tpu_custom_call.1} parent=87 // pred_check_branch
          %1184 = sbr.rel (%p1182) target = $region100
        $region99: #{tpu_custom_call.1} parent=87 // pred_region
          %s1185 = sand.u32 %s32, 1
          %s1186 = scalar_lea.sflag [#allocation12], %s1185
          %s1187 = sand.u32 %s318, 1
          %s1188 = smul.addr %s1187, 4
          %s1189 = scalar_lea.vmem [#allocation13], %s1188
          %1191 = dma.done %s1186, 64
        $region100: #{tpu_custom_call.1} parent=87 // pred_fallthru
          _
      $region88: #{tpu_custom_call.1} parent=5 // pred_fallthru
        _
    $region6: #{tpu_custom_call.1} parent=1 // loop_footer
      %s30 = sadd.s32 1, %s26
    $region7: #{tpu_custom_call.1} parent=1 // loop_footer_branch
      %25 = sbr.rel target = $region3
    $region8: #{tpu_custom_call.1} parent=1 // loop_exit
      _
    %1192 = vsyncpa [#allocation6], 1
    %s1193 = scalar_lea.sflag [#allocation6], 1
    %1194 = vsyncpa %s1193, 1
    %1195 = vsyncpa [#allocation9], 1
    %1196 = vsyncpa [#allocation7], 1
    %s1197 = scalar_lea.sflag [#allocation7], 1
    %1198 = vsyncpa %s1197, 1
    %1199 = vsyncpa [#allocation12], 1
    %s1200 = scalar_lea.sflag [#allocation12], 1
    %1201 = vsyncpa %s1200, 1

</llo_original>
